<compile_context>
chip_gen: v5e
topology: v5e:2x2
jax: 0.10.0
libtpu: 0.0.40
codegen_flags: <defaults>
</compile_context>

<pallas_src>
import functools
import math

import jax
import jax.numpy as jnp
import numpy as np
from jax.experimental import pallas as pl
from jax.experimental.pallas import tpu as pltpu

_HIGHEST = jax.lax.Precision.HIGHEST


def _round_up(n, m):
    return ((n + m - 1) // m) * m


def _tpu_tuning():
    """(block_m, block_n, vmem_limit_bytes, split_rows) per TPU generation."""
    try:
        vmem = int(pltpu.get_tpu_info().vmem_capacity_bytes)
    except Exception:
        vmem = 128 * 1024 * 1024
    if vmem <= 64 * 1024 * 1024:            # v7x-class: 64 MiB/TC, 2 TCs/chip
        return 512, 1024, 48 * 1024 * 1024, True
    return 512, 2048, 96 * 1024 * 1024, False   # v5e / v6e (128 MiB VMEM)


def _plan(n_nodes, block_m=None, block_n=None):
    """Pick (tm, tn, n_pad, vmem_limit): pad N up to the tile, never shrink."""
    dbm, dbn, vmem_limit, split_rows = _tpu_tuning()
    bm = dbm if block_m is None else block_m
    bn = dbn if block_n is None else block_n
    cap = pl.next_power_of_2(_round_up(n_nodes, 128))
    tm = max(128, min(bm, cap))
    tn = max(128, min(bn, cap))
    n_pad = _round_up(n_nodes, math.lcm(tm, tn))
    if split_rows and tm == n_pad and n_pad >= 256:
        tm = n_pad // 2        # keep >= 2 row tiles so both v7x TCs get work
    return tm, tn, n_pad, vmem_limit


def prepare_graph(adj, *, block_m=None, block_n=None):
    """Build the padded int8 adjacency + column-bias row ONCE (reusable)."""
    adj = jnp.asarray(adj)
    n = adj.shape[0]
    tm, tn, n_pad, vmem_limit = _plan(n, block_m, block_n)
    adj_p = (jnp.zeros((n_pad, n_pad), jnp.int8)
             .at[:n, :n].set((adj > 0).astype(jnp.int8)))
    # Non-edges of real columns -> -1e12 (like the reference); padded columns
    # -> -1e30 so rows with no edges still average over the real N only.
    col = jax.lax.broadcasted_iota(jnp.int32, (1, n_pad), 1)
    bias = jnp.where(col < n, jnp.float32(-1.0e12), jnp.float32(-1.0e30))
    return {"adj_p": adj_p, "bias": bias, "n": n, "n_pad": n_pad,
            "tm": tm, "tn": tn, "vmem_limit": vmem_limit}


# ---------------------------------------------------------------------------
# Kernel 1: row-tiled projection  h = inp @ W  and fused  fg = h @ [a1|a2]
# ---------------------------------------------------------------------------
def _proj_kernel(inp_ref, w_ref, a_ref, h_ref, fg_ref, *, precision):
    h = jnp.dot(inp_ref[...], w_ref[...],
                preferred_element_type=jnp.float32, precision=precision)
    h_c = h.astype(h_ref.dtype)
    h_ref[...] = h_c
    # fg[:, 0] = h @ a1 (query side f), fg[:, 1] = h @ a2 (key side g)
    fg_ref[...] = jnp.dot(h_c, a_ref[...],
                          preferred_element_type=jnp.float32,
                          precision=precision)


# ---------------------------------------------------------------------------
# Kernel 2: flash-style tiled GAT attention with online softmax
# ---------------------------------------------------------------------------
def _gat_attention_kernel(f_ref, gt_ref, bias_ref, adj_ref, h_ref, out_ref,
                          m_sc, l_sc, acc_sc, *,
                          alpha, concat, approx_recip, precision):
    j = pl.program_id(1)

    @pl.when(j == 0)
    def _init():
        m_sc[...] = jnp.full_like(m_sc, -jnp.inf)
        l_sc[...] = jnp.zeros_like(l_sc)
        acc_sc[...] = jnp.zeros_like(acc_sc)

    # e[i, j] = LeakyReLU(f[i] + g[j])   (decomposed concat([h_i, h_j]) @ a)
    e = f_ref[...] + gt_ref[...]                 # [TM,1]+[1,TN] -> [TM,TN]
    e = jnp.maximum(e, alpha * e)                # LeakyReLU (0 < alpha < 1)

    # Precomputed column bias handles both non-edges and padded columns.
    s = jnp.where(adj_ref[...] > 0, e, bias_ref[...])

    # Online-softmax update (running row max / row sum / weighted accumulator).
    m_prev = m_sc[...]
    m_new = jnp.maximum(m_prev, jnp.max(s, axis=1, keepdims=True))
    corr = jnp.exp(m_prev - m_new)
    p = jnp.exp(s - m_new)
    l_sc[...] = corr * l_sc[...] + jnp.sum(p, axis=1, keepdims=True)
    acc_sc[...] = corr * acc_sc[...] + jnp.dot(
        p.astype(h_ref.dtype), h_ref[...],
        preferred_element_type=jnp.float32, precision=precision)
    m_sc[...] = m_new

    # TODO(synk): F.dropout on the attention weights omitted (eval semantics).

    @pl.when(j == pl.num_programs(1) - 1)
    def _finalize():
        inv_l = pl.reciprocal(l_sc[...], approx=approx_recip)
        hp = acc_sc[...] * inv_l
        if concat:  # ELU (alpha = 1)
            hp = jnp.where(hp > 0, hp, jnp.exp(jnp.minimum(hp, 0.0)) - 1.0)
        out_ref[...] = hp.astype(out_ref.dtype)


# ---------------------------------------------------------------------------
# Wrapper
# ---------------------------------------------------------------------------
def gat_forward(inp, W, a, adj=None, *, graph=None, alpha=0.2, concat=True,
                fast_math=True, out_dtype=jnp.float32,
                block_m=None, block_n=None):
    inp = jnp.asarray(inp, jnp.float32)
    W = jnp.asarray(W, jnp.float32)
    a = jnp.asarray(a, jnp.float32)

    N, fin = inp.shape
    fout = W.shape[1]

    if graph is None:
        graph = prepare_graph(adj, block_m=block_m, block_n=block_n)
    adj_p, bias = graph["adj_p"], graph["bias"]
    n_pad, tm, tn = graph["n_pad"], graph["tm"], graph["tn"]
    vmem_limit = graph["vmem_limit"]

    fin_pad = _round_up(fin, 128)
    fo_pad = _round_up(fout, 128)      # lane-dense h / output
    # TODO(synk): for multi-head GAT with small fout, pack heads along the
    # lane axis instead of zero-padding each head's fout up to 128.

    mm_dtype = jnp.bfloat16 if fast_math else jnp.float32
    precision = jax.lax.Precision.DEFAULT if fast_math else _HIGHEST

    inp_p = (jnp.zeros((n_pad, fin_pad), mm_dtype)
             .at[:N, :fin].set(inp.astype(mm_dtype)))
    w_p = (jnp.zeros((fin_pad, fo_pad), mm_dtype)
           .at[:fin, :fout].set(W.astype(mm_dtype)))
    # a = [a1; a2] -> a_mat = [a1 | a2]  (tiny, fused into kernel 1)
    a_mat = jnp.concatenate([a[:fout, :], a[fout:, :]], axis=1)   # [fout, 2]
    a_p = (jnp.zeros((fo_pad, 2), mm_dtype)
           .at[:fout, :].set(a_mat.astype(mm_dtype)))

    # --- kernel 1: h = inp @ W  and  fg = h @ [a1|a2] ----------------------
    proj = functools.partial(_proj_kernel, precision=precision)
    h_p, fg = pl.pallas_call(
        proj,
        out_shape=(jax.ShapeDtypeStruct((n_pad, fo_pad), mm_dtype),
                   jax.ShapeDtypeStruct((n_pad, 2), jnp.float32)),
        grid=(n_pad // tm,),
        in_specs=[pl.BlockSpec((tm, fin_pad), lambda i: (i, 0)),
                  pl.BlockSpec((fin_pad, fo_pad), lambda i: (0, 0)),
                  pl.BlockSpec((fo_pad, 2), lambda i: (0, 0))],
        out_specs=(pl.BlockSpec((tm, fo_pad), lambda i: (i, 0)),
                   pl.BlockSpec((tm, 2), lambda i: (i, 0))),
        compiler_params=pltpu.CompilerParams(
            dimension_semantics=("parallel",),
            vmem_limit_bytes=vmem_limit),
    )(inp_p, w_p, a_p)

    f = fg[:, 0:1]                        # [N_pad, 1]  (query side)
    gt = jnp.transpose(fg[:, 1:2])        # [1, N_pad]  (key side, hoisted T)

    # --- kernel 2: tiled online-softmax attention --------------------------
    kernel = functools.partial(
        _gat_attention_kernel, alpha=float(alpha), concat=bool(concat),
        approx_recip=bool(fast_math), precision=precision)
    out_p = pl.pallas_call(
        kernel,
        out_shape=jax.ShapeDtypeStruct((n_pad, fo_pad), out_dtype),
        grid=(n_pad // tm, n_pad // tn),
        in_specs=[
            pl.BlockSpec((tm, 1), lambda i, j: (i, 0)),        # f
            pl.BlockSpec((1, tn), lambda i, j: (0, j)),        # g^T
            pl.BlockSpec((1, tn), lambda i, j: (0, j)),        # column bias
            pl.BlockSpec((tm, tn), lambda i, j: (i, j)),       # adj (int8)
            pl.BlockSpec((tn, fo_pad), lambda i, j: (j, 0)),   # h (values)
        ],
        out_specs=pl.BlockSpec((tm, fo_pad), lambda i, j: (i, 0)),
        scratch_shapes=[pltpu.VMEM((tm, 1), jnp.float32),       # running max
                        pltpu.VMEM((tm, 1), jnp.float32),       # running sum
                        pltpu.VMEM((tm, fo_pad), jnp.float32)], # accumulator
        compiler_params=pltpu.CompilerParams(
            dimension_semantics=("parallel", "arbitrary"),
            vmem_limit_bytes=vmem_limit),
    )(f, gt, bias, adj_p, h_p)

    return out_p[:N, :fout]


# ---------------------------------------------------------------------------
# Reference + demo
# ---------------------------------------------------------------------------
def _xavier_uniform(key, shape, gain):
    fan_in, fan_out = shape
    bound = gain * math.sqrt(6.0 / (fan_in + fan_out))
    return jax.random.uniform(key, shape, jnp.float32, minval=-bound, maxval=bound)


def _reference(inp, W, a, adj, alpha, concat):
    h = jnp.dot(inp, W, precision=_HIGHEST)
    N = h.shape[0]
    fo = W.shape[1]
    a_input = jnp.concatenate(
        [jnp.repeat(h, N, axis=0), jnp.tile(h, (N, 1))], axis=1
    ).reshape(N, N, 2 * fo)
    e = jnp.squeeze(jnp.matmul(a_input, a, precision=_HIGHEST), axis=2)
    e = jnp.where(e > 0, e, alpha * e)
    att = jnp.where(adj > 0, e, -1.0e12)
    att = jax.nn.softmax(att, axis=1)
    hp = jnp.matmul(att, h, precision=_HIGHEST)
    return jax.nn.elu(hp) if concat else hp


if __name__ == "__main__":
    # Shapes implied by the module: N=5 nodes (adjacency in the source),
    # in_features=16, out_features=8.
    N, in_features, out_features = 5, 16, 8
    alpha, concat = 0.2, True

    key = jax.random.PRNGKey(0)
    k_inp, k_w, k_a = jax.random.split(key, 3)

    inp = jax.random.normal(k_inp, (N, in_features), jnp.float32)
    W = _xavier_uniform(k_w, (in_features, out_features), gain=1.414)
    a = _xavier_uniform(k_a, (2 * out_features, 1), gain=1.414)
    adj = jnp.array(
        [[0, 1, 0, 1, 1],
         [0, 1, 0, 0, 0],
         [1, 1, 1, 0, 0],
         [0, 1, 0, 1, 1],
         [0, 1, 0, 1, 1]], dtype=jnp.int32)

    ref = _reference(inp, W, a, adj.astype(jnp.float32), alpha, concat)

    # Graph prep (padded adjacency + column bias) done ONCE, reused per call.
    graph = prepare_graph(adj)

    # Exact path: f32 MXU operands at HIGHEST precision, exact reciprocal.
    out_f32 = jax.block_until_ready(
        gat_forward(inp, W, a, graph=graph, alpha=alpha, concat=concat,
                    fast_math=False))
    np.testing.assert_allclose(np.asarray(out_f32), np.asarray(ref),
                               rtol=1e-4, atol=1e-4)

    # Fast path: bf16 MXU operands (f32 accumulate) + approx EUP reciprocal.
    out_fast = jax.block_until_ready(
        gat_forward(inp, W, a, graph=graph, alpha=alpha, concat=concat,
                    fast_math=True))
    np.testing.assert_allclose(np.asarray(out_fast), np.asarray(ref),
                               rtol=1e-1, atol=1e-1)

    print("KERNEL_OK")
</pallas_src>

<mosaic_0001>
module attributes {stable_mosaic.version = 11 : i64} {
  func.func @_proj_kernel(%arg0: i32, %arg1: memref<128x128xf32, #tpu.memory_space<vmem>>, %arg2: memref<128x128xf32, #tpu.memory_space<vmem>>, %arg3: memref<128x2xf32, #tpu.memory_space<vmem>>, %arg4: memref<128x128xf32, #tpu.memory_space<vmem>>, %arg5: memref<128x2xf32, #tpu.memory_space<vmem>>) attributes {dimension_semantics = [#tpu.dimension_semantics<parallel>], iteration_bounds = array<i64: 1>, scalar_prefetch = 0 : i64, scratch_operands = 0 : i64, tpu.core_type = #tpu.core_type<tc>, window_params = [{transform_indices = @transform_0, window_bounds = array<i64: 128, 128>}, {pipeline_mode = #tpu.pipeline_mode<synchronous>, transform_indices = @transform_1, window_bounds = array<i64: 128, 128>}, {pipeline_mode = #tpu.pipeline_mode<synchronous>, transform_indices = @transform_2, window_bounds = array<i64: 128, 2>}, {transform_indices = @transform_3, window_bounds = array<i64: 128, 128>}, {transform_indices = @transform_4, window_bounds = array<i64: 128, 2>}]} {
    %c0 = arith.constant 0 : index
    %c0_0 = arith.constant 0 : index
    %0 = vector.load %arg1[%c0, %c0_0] : memref<128x128xf32, #tpu.memory_space<vmem>>, vector<128x128xf32>
    %c0_1 = arith.constant 0 : index
    %c0_2 = arith.constant 0 : index
    %1 = vector.load %arg2[%c0_1, %c0_2] : memref<128x128xf32, #tpu.memory_space<vmem>>, vector<128x128xf32>
    %cst = arith.constant dense<0.000000e+00> : vector<128x128xf32>
    %2 = tpu.matmul %0, %1, %cst {dimension_numbers = #tpu.dot_dimension_numbers<[1], [0], [0], [1], [0, 0, 1, 1], [], []>, precision = #tpu.contract_precision<fp32>} : vector<128x128xf32>, vector<128x128xf32>, vector<128x128xf32> -> vector<128x128xf32>
    %c0_3 = arith.constant 0 : index
    %c0_4 = arith.constant 0 : index
    %3 = vector.load %arg4[%c0_3, %c0_4] : memref<128x128xf32, #tpu.memory_space<vmem>>, vector<128x128xf32>
    tpu.vector_store %arg4[%c0_3, %c0_4], %2 {strides = array<i32>} : memref<128x128xf32, #tpu.memory_space<vmem>>, vector<128x128xf32>,
    %c0_5 = arith.constant 0 : index
    %c0_6 = arith.constant 0 : index
    %4 = vector.load %arg3[%c0_5, %c0_6] : memref<128x2xf32, #tpu.memory_space<vmem>>, vector<128x2xf32>
    %cst_7 = arith.constant dense<0.000000e+00> : vector<128x2xf32>
    %5 = tpu.matmul %2, %4, %cst_7 {dimension_numbers = #tpu.dot_dimension_numbers<[1], [0], [0], [1], [0, 0, 1, 1], [], []>, precision = #tpu.contract_precision<fp32>} : vector<128x128xf32>, vector<128x2xf32>, vector<128x2xf32> -> vector<128x2xf32>
    %c0_8 = arith.constant 0 : index
    %c0_9 = arith.constant 0 : index
    %6 = vector.load %arg5[%c0_8, %c0_9] : memref<128x2xf32, #tpu.memory_space<vmem>>, vector<128x2xf32>
    tpu.vector_store %arg5[%c0_8, %c0_9], %5 {strides = array<i32>} : memref<128x2xf32, #tpu.memory_space<vmem>>, vector<128x2xf32>,
    return
  }
  func.func @transform_0(%arg0: i32) -> (i32, i32) {
    %c0_i32 = arith.constant 0 : i32
    %c0_i32_0 = arith.constant 0 : i32
    return %arg0, %c0_i32 : i32, i32
  }
  func.func @transform_1(%arg0: i32) -> (i32, i32) {
    %c0_i32 = arith.constant 0 : i32
    %c0_i32_0 = arith.constant 0 : i32
    %c0_i32_1 = arith.constant 0 : i32
    return %c0_i32, %c0_i32_0 : i32, i32
  }
  func.func @transform_2(%arg0: i32) -> (i32, i32) {
    %c0_i32 = arith.constant 0 : i32
    %c0_i32_0 = arith.constant 0 : i32
    %c0_i32_1 = arith.constant 0 : i32
    return %c0_i32, %c0_i32_0 : i32, i32
  }
  func.func @transform_3(%arg0: i32) -> (i32, i32) {
    %c0_i32 = arith.constant 0 : i32
    %c0_i32_0 = arith.constant 0 : i32
    return %arg0, %c0_i32 : i32, i32
  }
  func.func @transform_4(%arg0: i32) -> (i32, i32) {
    %c0_i32 = arith.constant 0 : i32
    %c0_i32_0 = arith.constant 0 : i32
    return %arg0, %c0_i32 : i32, i32
  }
}

</mosaic_0001>

<llo_original>
// kernel: tpu_custom_call.1
$region0: #{tpu_custom_call.1}
  #allocation0 [shape = 'u32[]', space=smem, size = 0x4, offset = 0x4, fixed_abs, tag = 'smem constant byte address 0x4 - core index']
  #allocation1 [shape = 'u32[72,128]{1,0:T(1,128)}', space=vmem, size = 0x9000, scoped, tag = 'internal scratch']
  %s0 = inlined_call_operand.vmem [shape: f32[128,128], index: 0, kind: input, shape index: {}]
  %s1 = inlined_call_operand.hbm [shape: f32[128,128], index: 1, kind: input, shape index: {}]
  %s2 = inlined_call_operand.vmem [shape: f32[128,2], index: 2, kind: input, shape index: {}]
  %s3 = inlined_call_operand.hbm [shape: f32[128,128], index: 3, kind: output, shape index: {0}]
  %s4 = inlined_call_operand.vmem [shape: f32[128,2], index: 4, kind: output, shape index: {1}]
  %5 = xla_tuple %s3, %s4
  %s6 = sld [smem:[#allocation0]]
  $region34: #{tpu_custom_call.1} parent=0
    _
  %s8 = ssub.s32 1, %s6
  %s9 = scalar_select 0, %s8, %s6
  $region1: #{tpu_custom_call.1} parent=0
    #allocation2 [shape = 'u8[65536]{0}', space=vmem, size = 0x10000, scoped, tag = 'input window, operand 1, single buffered']
    #allocation3 [shape = 's32[1]{0}', space=sflag, size = 0x4, scoped, tag = 'scoped memory for tpu_custom_call.1']
    #allocation4 [shape = 's32[1]{0}', space=sflag, size = 0x4, scoped, tag = 'scoped memory for tpu_custom_call.1']
    #allocation5 [shape = 'u8[65536]{0}', space=vmem, size = 0x10000, scoped, tag = 'output window, operand 0, single buffered']
    %10 = vsyncpa [#allocation3], 0
    %11 = vsyncpa [#allocation4], 0
    // Predicated region
    $region2: #{tpu_custom_call.1} parent=1 // pred_check
      _
    $region3: #{tpu_custom_call.1} parent=1 // pred_check_branch
      %13 = sbr.rel (0) target = $region5
    $region4: #{tpu_custom_call.1} parent=1 // pred_region
      _
    $region5: #{tpu_custom_call.1} parent=1 // pred_fallthru
      _
    // Predicated region
    $region6: #{tpu_custom_call.1} parent=1 // pred_check
      _
    $region7: #{tpu_custom_call.1} parent=1 // pred_check_branch
      %15 = sbr.rel (0) target = $region9
    $region8: #{tpu_custom_call.1} parent=1 // pred_region
      %17 = vsyncadd [#allocation3], 0
      %s18 = sshll.u32 %s1, 4
      %s19 = int_to_ptr.hbm [resolvable:$true] %s18
      %s20 = sshll.u32 [#allocation2], 4
      %s21 = int_to_ptr.vmem [resolvable:$true] %s20
      %26 = dma.hbm_to_vmem [thread:$0]  %s19, 2048, %s21, [#allocation3], 128, 128, 8
    $region9: #{tpu_custom_call.1} parent=1 // pred_fallthru
      _
    // Predicated region
    $region10: #{tpu_custom_call.1} parent=1 // pred_check
      _
    $region11: #{tpu_custom_call.1} parent=1 // pred_check_branch
      %28 = sbr.rel (0) target = $region13
    $region12: #{tpu_custom_call.1} parent=1 // pred_region
      _
    $region13: #{tpu_custom_call.1} parent=1 // pred_fallthru
      _
    // Predicated region
    $region14: #{tpu_custom_call.1} parent=1 // pred_check
      _
    $region15: #{tpu_custom_call.1} parent=1 // pred_check_branch
      %30 = sbr.rel (0) target = $region17
    $region16: #{tpu_custom_call.1} parent=1 // pred_region
      %32 = dma.done [#allocation3], 2048
    $region17: #{tpu_custom_call.1} parent=1 // pred_fallthru
      _
    %v33 = vld [vmem:[%s0] sm:$0xff]
    %v34 = vld [vmem:[%s0 + $0x8] sm:$0xff]
    %v35 = vld [vmem:[%s0 + $0x10] sm:$0xff]
    %v36 = vld [vmem:[%s0 + $0x18] sm:$0xff]
    %v37 = vld [vmem:[%s0 + $0x20] sm:$0xff]
    %v38 = vld [vmem:[%s0 + $0x28] sm:$0xff]
    %v39 = vld [vmem:[%s0 + $0x30] sm:$0xff]
    %v40 = vld [vmem:[%s0 + $0x38] sm:$0xff]
    %v41 = vld [vmem:[%s0 + $0x40] sm:$0xff]
    %v42 = vld [vmem:[%s0 + $0x48] sm:$0xff]
    %v43 = vld [vmem:[%s0 + $0x50] sm:$0xff]
    %v44 = vld [vmem:[%s0 + $0x58] sm:$0xff]
    %v45 = vld [vmem:[%s0 + $0x60] sm:$0xff]
    %v46 = vld [vmem:[%s0 + $0x68] sm:$0xff]
    %v47 = vld [vmem:[%s0 + $0x70] sm:$0xff]
    %v48 = vld [vmem:[%s0 + $0x78] sm:$0xff]
    %v49 = vld [vmem:[#allocation2] sm:$0xff]
    %v50 = vld [vmem:[#allocation2 + $0x8] sm:$0xff]
    %v51 = vld [vmem:[#allocation2 + $0x10] sm:$0xff]
    %v52 = vld [vmem:[#allocation2 + $0x18] sm:$0xff]
    %v53 = vld [vmem:[#allocation2 + $0x20] sm:$0xff]
    %v54 = vld [vmem:[#allocation2 + $0x28] sm:$0xff]
    %v55 = vld [vmem:[#allocation2 + $0x30] sm:$0xff]
    %v56 = vld [vmem:[#allocation2 + $0x38] sm:$0xff]
    %v57 = vld [vmem:[#allocation2 + $0x40] sm:$0xff]
    %v58 = vld [vmem:[#allocation2 + $0x48] sm:$0xff]
    %v59 = vld [vmem:[#allocation2 + $0x50] sm:$0xff]
    %v60 = vld [vmem:[#allocation2 + $0x58] sm:$0xff]
    %v61 = vld [vmem:[#allocation2 + $0x60] sm:$0xff]
    %v62 = vld [vmem:[#allocation2 + $0x68] sm:$0xff]
    %v63 = vld [vmem:[#allocation2 + $0x70] sm:$0xff]
    %v64 = vld [vmem:[#allocation2 + $0x78] sm:$0xff]
    %v65 = vand.u32 %v64, 4294901760
    %66 = vmatpush.msra.mxu0 %v65
    %v67 = vand.u32 %v63, 4294901760
    %68 = vmatpush.msra.mxu0 %v67
    %v69 = vand.u32 %v62, 4294901760
    %70 = vmatpush.msra.mxu0 %v69
    %v71 = vand.u32 %v61, 4294901760
    %72 = vmatpush.msra.mxu0 %v71
    %v73 = vand.u32 %v60, 4294901760
    %74 = vmatpush.msra.mxu0 %v73
    %v75 = vand.u32 %v59, 4294901760
    %76 = vmatpush.msra.mxu0 %v75
    %v77 = vand.u32 %v58, 4294901760
    %78 = vmatpush.msra.mxu0 %v77
    %v79 = vand.u32 %v57, 4294901760
    %80 = vmatpush.msra.mxu0 %v79
    %v81 = vand.u32 %v56, 4294901760
    %82 = vmatpush.msra.mxu0 %v81
    %v83 = vand.u32 %v55, 4294901760
    %84 = vmatpush.msra.mxu0 %v83
    %v85 = vand.u32 %v54, 4294901760
    %86 = vmatpush.msra.mxu0 %v85
    %v87 = vand.u32 %v53, 4294901760
    %88 = vmatpush.msra.mxu0 %v87
    %v89 = vand.u32 %v52, 4294901760
    %90 = vmatpush.msra.mxu0 %v89
    %v91 = vand.u32 %v51, 4294901760
    %92 = vmatpush.msra.mxu0 %v91
    %v93 = vand.u32 %v50, 4294901760
    %94 = vmatpush.msra.mxu0 %v93
    %v95 = vand.u32 %v49, 4294901760
    %96 = vmatpush.msra.mxu0 %v95
    %v97 = vand.u32 %v33, 4294901760
    %v98 = vsub.f32 %v33, %v97
    %v99 = vand.u32 %v98, 4294901760
    %v100 = vsub.f32 %v98, %v99
    %v101 = vand.u32 %v100, 4294901760
    %102 = vmatmul.f32.gmra.mxu0 %v101
    %v103 = vpop.f32.mrf.mxu0
    %v104 = vadd.f32 0.0, %v103
    %v105 = vand.u32 %v34, 4294901760
    %v106 = vsub.f32 %v34, %v105
    %v107 = vand.u32 %v106, 4294901760
    %v108 = vsub.f32 %v106, %v107
    %v109 = vand.u32 %v108, 4294901760
    %110 = vmatmul.f32.gmra.mxu0 %v109
    %v111 = vpop.f32.mrf.mxu0
    %v112 = vadd.f32 0.0, %v111
    %v113 = vand.u32 %v35, 4294901760
    %v114 = vsub.f32 %v35, %v113
    %v115 = vand.u32 %v114, 4294901760
    %v116 = vsub.f32 %v114, %v115
    %v117 = vand.u32 %v116, 4294901760
    %118 = vmatmul.f32.gmra.mxu0 %v117
    %v119 = vpop.f32.mrf.mxu0
    %v120 = vadd.f32 0.0, %v119
    %v121 = vand.u32 %v36, 4294901760
    %v122 = vsub.f32 %v36, %v121
    %v123 = vand.u32 %v122, 4294901760
    %v124 = vsub.f32 %v122, %v123
    %v125 = vand.u32 %v124, 4294901760
    %126 = vmatmul.f32.gmra.mxu0 %v125
    %v127 = vpop.f32.mrf.mxu0
    %v128 = vadd.f32 0.0, %v127
    %v129 = vand.u32 %v37, 4294901760
    %v130 = vsub.f32 %v37, %v129
    %v131 = vand.u32 %v130, 4294901760
    %v132 = vsub.f32 %v130, %v131
    %v133 = vand.u32 %v132, 4294901760
    %134 = vmatmul.f32.gmra.mxu0 %v133
    %v135 = vpop.f32.mrf.mxu0
    %v136 = vadd.f32 0.0, %v135
    %v137 = vand.u32 %v38, 4294901760
    %v138 = vsub.f32 %v38, %v137
    %v139 = vand.u32 %v138, 4294901760
    %v140 = vsub.f32 %v138, %v139
    %v141 = vand.u32 %v140, 4294901760
    %142 = vmatmul.f32.gmra.mxu0 %v141
    %v143 = vpop.f32.mrf.mxu0
    %v144 = vadd.f32 0.0, %v143
    %v145 = vand.u32 %v39, 4294901760
    %v146 = vsub.f32 %v39, %v145
    %v147 = vand.u32 %v146, 4294901760
    %v148 = vsub.f32 %v146, %v147
    %v149 = vand.u32 %v148, 4294901760
    %150 = vmatmul.f32.gmra.mxu0 %v149
    %v151 = vpop.f32.mrf.mxu0
    %v152 = vadd.f32 0.0, %v151
    %v153 = vand.u32 %v40, 4294901760
    %v154 = vsub.f32 %v40, %v153
    %v155 = vand.u32 %v154, 4294901760
    %v156 = vsub.f32 %v154, %v155
    %v157 = vand.u32 %v156, 4294901760
    %158 = vmatmul.f32.gmra.mxu0 %v157
    %v159 = vpop.f32.mrf.mxu0
    %v160 = vadd.f32 0.0, %v159
    %v161 = vand.u32 %v41, 4294901760
    %v162 = vsub.f32 %v41, %v161
    %v163 = vand.u32 %v162, 4294901760
    %v164 = vsub.f32 %v162, %v163
    %v165 = vand.u32 %v164, 4294901760
    %166 = vmatmul.f32.gmra.mxu0 %v165
    %v167 = vpop.f32.mrf.mxu0
    %v168 = vadd.f32 0.0, %v167
    %v169 = vand.u32 %v42, 4294901760
    %v170 = vsub.f32 %v42, %v169
    %v171 = vand.u32 %v170, 4294901760
    %v172 = vsub.f32 %v170, %v171
    %v173 = vand.u32 %v172, 4294901760
    %174 = vmatmul.f32.gmra.mxu0 %v173
    %v175 = vpop.f32.mrf.mxu0
    %v176 = vadd.f32 0.0, %v175
    %v177 = vand.u32 %v43, 4294901760
    %v178 = vsub.f32 %v43, %v177
    %v179 = vand.u32 %v178, 4294901760
    %v180 = vsub.f32 %v178, %v179
    %v181 = vand.u32 %v180, 4294901760
    %182 = vmatmul.f32.gmra.mxu0 %v181
    %v183 = vpop.f32.mrf.mxu0
    %v184 = vadd.f32 0.0, %v183
    %v185 = vand.u32 %v44, 4294901760
    %v186 = vsub.f32 %v44, %v185
    %v187 = vand.u32 %v186, 4294901760
    %v188 = vsub.f32 %v186, %v187
    %v189 = vand.u32 %v188, 4294901760
    %190 = vmatmul.f32.gmra.mxu0 %v189
    %v191 = vpop.f32.mrf.mxu0
    %v192 = vadd.f32 0.0, %v191
    %v193 = vand.u32 %v45, 4294901760
    %v194 = vsub.f32 %v45, %v193
    %v195 = vand.u32 %v194, 4294901760
    %v196 = vsub.f32 %v194, %v195
    %v197 = vand.u32 %v196, 4294901760
    %198 = vmatmul.f32.gmra.mxu0 %v197
    %v199 = vpop.f32.mrf.mxu0
    %v200 = vadd.f32 0.0, %v199
    %v201 = vand.u32 %v46, 4294901760
    %v202 = vsub.f32 %v46, %v201
    %v203 = vand.u32 %v202, 4294901760
    %v204 = vsub.f32 %v202, %v203
    %v205 = vand.u32 %v204, 4294901760
    %206 = vmatmul.f32.gmra.mxu0 %v205
    %v207 = vpop.f32.mrf.mxu0
    %v208 = vadd.f32 0.0, %v207
    %v209 = vand.u32 %v47, 4294901760
    %v210 = vsub.f32 %v47, %v209
    %v211 = vand.u32 %v210, 4294901760
    %v212 = vsub.f32 %v210, %v211
    %v213 = vand.u32 %v212, 4294901760
    %214 = vmatmul.f32.gmra.mxu0 %v213
    %v215 = vpop.f32.mrf.mxu0
    %v216 = vadd.f32 0.0, %v215
    %v217 = vand.u32 %v48, 4294901760
    %v218 = vsub.f32 %v48, %v217
    %v219 = vand.u32 %v218, 4294901760
    %v220 = vsub.f32 %v218, %v219
    %v221 = vand.u32 %v220, 4294901760
    %222 = vmatmul.f32.gmra.mxu0 %v221
    %v223 = vpop.f32.mrf.mxu0
    %v224 = vadd.f32 0.0, %v223
    %225 = vdwg.mxu0
    %v226 = vand.u32 %v64, 4294901760
    %v227 = vsub.f32 %v64, %v226
    %v228 = vand.u32 %v227, 4294901760
    %v229 = vsub.f32 %v227, %v228
    %v230 = vand.u32 %v229, 4294901760
    %231 = vmatpush.msra.mxu0 %v230
    %v232 = vand.u32 %v63, 4294901760
    %v233 = vsub.f32 %v63, %v232
    %v234 = vand.u32 %v233, 4294901760
    %v235 = vsub.f32 %v233, %v234
    %v236 = vand.u32 %v235, 4294901760
    %237 = vmatpush.msra.mxu0 %v236
    %v238 = vand.u32 %v62, 4294901760
    %v239 = vsub.f32 %v62, %v238
    %v240 = vand.u32 %v239, 4294901760
    %v241 = vsub.f32 %v239, %v240
    %v242 = vand.u32 %v241, 4294901760
    %243 = vmatpush.msra.mxu0 %v242
    %v244 = vand.u32 %v61, 4294901760
    %v245 = vsub.f32 %v61, %v244
    %v246 = vand.u32 %v245, 4294901760
    %v247 = vsub.f32 %v245, %v246
    %v248 = vand.u32 %v247, 4294901760
    %249 = vmatpush.msra.mxu0 %v248
    %v250 = vand.u32 %v60, 4294901760
    %v251 = vsub.f32 %v60, %v250
    %v252 = vand.u32 %v251, 4294901760
    %v253 = vsub.f32 %v251, %v252
    %v254 = vand.u32 %v253, 4294901760
    %255 = vmatpush.msra.mxu0 %v254
    %v256 = vand.u32 %v59, 4294901760
    %v257 = vsub.f32 %v59, %v256
    %v258 = vand.u32 %v257, 4294901760
    %v259 = vsub.f32 %v257, %v258
    %v260 = vand.u32 %v259, 4294901760
    %261 = vmatpush.msra.mxu0 %v260
    %v262 = vand.u32 %v58, 4294901760
    %v263 = vsub.f32 %v58, %v262
    %v264 = vand.u32 %v263, 4294901760
    %v265 = vsub.f32 %v263, %v264
    %v266 = vand.u32 %v265, 4294901760
    %267 = vmatpush.msra.mxu0 %v266
    %v268 = vand.u32 %v57, 4294901760
    %v269 = vsub.f32 %v57, %v268
    %v270 = vand.u32 %v269, 4294901760
    %v271 = vsub.f32 %v269, %v270
    %v272 = vand.u32 %v271, 4294901760
    %273 = vmatpush.msra.mxu0 %v272
    %v274 = vand.u32 %v56, 4294901760
    %v275 = vsub.f32 %v56, %v274
    %v276 = vand.u32 %v275, 4294901760
    %v277 = vsub.f32 %v275, %v276
    %v278 = vand.u32 %v277, 4294901760
    %279 = vmatpush.msra.mxu0 %v278
    %v280 = vand.u32 %v55, 4294901760
    %v281 = vsub.f32 %v55, %v280
    %v282 = vand.u32 %v281, 4294901760
    %v283 = vsub.f32 %v281, %v282
    %v284 = vand.u32 %v283, 4294901760
    %285 = vmatpush.msra.mxu0 %v284
    %v286 = vand.u32 %v54, 4294901760
    %v287 = vsub.f32 %v54, %v286
    %v288 = vand.u32 %v287, 4294901760
    %v289 = vsub.f32 %v287, %v288
    %v290 = vand.u32 %v289, 4294901760
    %291 = vmatpush.msra.mxu0 %v290
    %v292 = vand.u32 %v53, 4294901760
    %v293 = vsub.f32 %v53, %v292
    %v294 = vand.u32 %v293, 4294901760
    %v295 = vsub.f32 %v293, %v294
    %v296 = vand.u32 %v295, 4294901760
    %297 = vmatpush.msra.mxu0 %v296
    %v298 = vand.u32 %v52, 4294901760
    %v299 = vsub.f32 %v52, %v298
    %v300 = vand.u32 %v299, 4294901760
    %v301 = vsub.f32 %v299, %v300
    %v302 = vand.u32 %v301, 4294901760
    %303 = vmatpush.msra.mxu0 %v302
    %v304 = vand.u32 %v51, 4294901760
    %v305 = vsub.f32 %v51, %v304
    %v306 = vand.u32 %v305, 4294901760
    %v307 = vsub.f32 %v305, %v306
    %v308 = vand.u32 %v307, 4294901760
    %309 = vmatpush.msra.mxu0 %v308
    %v310 = vand.u32 %v50, 4294901760
    %v311 = vsub.f32 %v50, %v310
    %v312 = vand.u32 %v311, 4294901760
    %v313 = vsub.f32 %v311, %v312
    %v314 = vand.u32 %v313, 4294901760
    %315 = vmatpush.msra.mxu0 %v314
    %v316 = vand.u32 %v49, 4294901760
    %v317 = vsub.f32 %v49, %v316
    %v318 = vand.u32 %v317, 4294901760
    %v319 = vsub.f32 %v317, %v318
    %v320 = vand.u32 %v319, 4294901760
    %321 = vmatpush.msra.mxu0 %v320
    %v322 = vand.u32 %v33, 4294901760
    %323 = vmatmul.f32.gmra.mxu0 %v322
    %v324 = vpop.f32.mrf.mxu0
    %v325 = vadd.f32 %v104, %v324
    %v326 = vand.u32 %v34, 4294901760
    %327 = vmatmul.f32.gmra.mxu0 %v326
    %v328 = vpop.f32.mrf.mxu0
    %v329 = vadd.f32 %v112, %v328
    %v330 = vand.u32 %v35, 4294901760
    %331 = vmatmul.f32.gmra.mxu0 %v330
    %v332 = vpop.f32.mrf.mxu0
    %v333 = vadd.f32 %v120, %v332
    %v334 = vand.u32 %v36, 4294901760
    %335 = vmatmul.f32.gmra.mxu0 %v334
    %v336 = vpop.f32.mrf.mxu0
    %v337 = vadd.f32 %v128, %v336
    %v338 = vand.u32 %v37, 4294901760
    %339 = vmatmul.f32.gmra.mxu0 %v338
    %v340 = vpop.f32.mrf.mxu0
    %v341 = vadd.f32 %v136, %v340
    %v342 = vand.u32 %v38, 4294901760
    %343 = vmatmul.f32.gmra.mxu0 %v342
    %v344 = vpop.f32.mrf.mxu0
    %v345 = vadd.f32 %v144, %v344
    %v346 = vand.u32 %v39, 4294901760
    %347 = vmatmul.f32.gmra.mxu0 %v346
    %v348 = vpop.f32.mrf.mxu0
    %v349 = vadd.f32 %v152, %v348
    %v350 = vand.u32 %v40, 4294901760
    %351 = vmatmul.f32.gmra.mxu0 %v350
    %v352 = vpop.f32.mrf.mxu0
    %v353 = vadd.f32 %v160, %v352
    %v354 = vand.u32 %v41, 4294901760
    %355 = vmatmul.f32.gmra.mxu0 %v354
    %v356 = vpop.f32.mrf.mxu0
    %v357 = vadd.f32 %v168, %v356
    %v358 = vand.u32 %v42, 4294901760
    %359 = vmatmul.f32.gmra.mxu0 %v358
    %v360 = vpop.f32.mrf.mxu0
    %v361 = vadd.f32 %v176, %v360
    %v362 = vand.u32 %v43, 4294901760
    %363 = vmatmul.f32.gmra.mxu0 %v362
    %v364 = vpop.f32.mrf.mxu0
    %v365 = vadd.f32 %v184, %v364
    %v366 = vand.u32 %v44, 4294901760
    %367 = vmatmul.f32.gmra.mxu0 %v366
    %v368 = vpop.f32.mrf.mxu0
    %v369 = vadd.f32 %v192, %v368
    %v370 = vand.u32 %v45, 4294901760
    %371 = vmatmul.f32.gmra.mxu0 %v370
    %v372 = vpop.f32.mrf.mxu0
    %v373 = vadd.f32 %v200, %v372
    %v374 = vand.u32 %v46, 4294901760
    %375 = vmatmul.f32.gmra.mxu0 %v374
    %v376 = vpop.f32.mrf.mxu0
    %v377 = vadd.f32 %v208, %v376
    %v378 = vand.u32 %v47, 4294901760
    %379 = vmatmul.f32.gmra.mxu0 %v378
    %v380 = vpop.f32.mrf.mxu0
    %v381 = vadd.f32 %v216, %v380
    %v382 = vand.u32 %v48, 4294901760
    %383 = vmatmul.f32.gmra.mxu0 %v382
    %v384 = vpop.f32.mrf.mxu0
    %v385 = vadd.f32 %v224, %v384
    %386 = vdwg.mxu0
    %v387 = vand.u32 %v64, 4294901760
    %v388 = vsub.f32 %v64, %v387
    %389 = vmatpush.msra.mxu0 %v388
    %v390 = vand.u32 %v63, 4294901760
    %v391 = vsub.f32 %v63, %v390
    %392 = vmatpush.msra.mxu0 %v391
    %v393 = vand.u32 %v62, 4294901760
    %v394 = vsub.f32 %v62, %v393
    %395 = vmatpush.msra.mxu0 %v394
    %v396 = vand.u32 %v61, 4294901760
    %v397 = vsub.f32 %v61, %v396
    %398 = vmatpush.msra.mxu0 %v397
    %v399 = vand.u32 %v60, 4294901760
    %v400 = vsub.f32 %v60, %v399
    %401 = vmatpush.msra.mxu0 %v400
    %v402 = vand.u32 %v59, 4294901760
    %v403 = vsub.f32 %v59, %v402
    %404 = vmatpush.msra.mxu0 %v403
    %v405 = vand.u32 %v58, 4294901760
    %v406 = vsub.f32 %v58, %v405
    %407 = vmatpush.msra.mxu0 %v406
    %v408 = vand.u32 %v57, 4294901760
    %v409 = vsub.f32 %v57, %v408
    %410 = vmatpush.msra.mxu0 %v409
    %v411 = vand.u32 %v56, 4294901760
    %v412 = vsub.f32 %v56, %v411
    %413 = vmatpush.msra.mxu0 %v412
    %v414 = vand.u32 %v55, 4294901760
    %v415 = vsub.f32 %v55, %v414
    %416 = vmatpush.msra.mxu0 %v415
    %v417 = vand.u32 %v54, 4294901760
    %v418 = vsub.f32 %v54, %v417
    %419 = vmatpush.msra.mxu0 %v418
    %v420 = vand.u32 %v53, 4294901760
    %v421 = vsub.f32 %v53, %v420
    %422 = vmatpush.msra.mxu0 %v421
    %v423 = vand.u32 %v52, 4294901760
    %v424 = vsub.f32 %v52, %v423
    %425 = vmatpush.msra.mxu0 %v424
    %v426 = vand.u32 %v51, 4294901760
    %v427 = vsub.f32 %v51, %v426
    %428 = vmatpush.msra.mxu0 %v427
    %v429 = vand.u32 %v50, 4294901760
    %v430 = vsub.f32 %v50, %v429
    %431 = vmatpush.msra.mxu0 %v430
    %v432 = vand.u32 %v49, 4294901760
    %v433 = vsub.f32 %v49, %v432
    %434 = vmatpush.msra.mxu0 %v433
    %v435 = vand.u32 %v33, 4294901760
    %v436 = vsub.f32 %v33, %v435
    %437 = vmatmul.f32.gmra.mxu0 %v436
    %v438 = vpop.f32.mrf.mxu0
    %v439 = vadd.f32 %v325, %v438
    %v440 = vand.u32 %v34, 4294901760
    %v441 = vsub.f32 %v34, %v440
    %442 = vmatmul.f32.gmra.mxu0 %v441
    %v443 = vpop.f32.mrf.mxu0
    %v444 = vadd.f32 %v329, %v443
    %v445 = vand.u32 %v35, 4294901760
    %v446 = vsub.f32 %v35, %v445
    %447 = vmatmul.f32.gmra.mxu0 %v446
    %v448 = vpop.f32.mrf.mxu0
    %v449 = vadd.f32 %v333, %v448
    %v450 = vand.u32 %v36, 4294901760
    %v451 = vsub.f32 %v36, %v450
    %452 = vmatmul.f32.gmra.mxu0 %v451
    %v453 = vpop.f32.mrf.mxu0
    %v454 = vadd.f32 %v337, %v453
    %v455 = vand.u32 %v37, 4294901760
    %v456 = vsub.f32 %v37, %v455
    %457 = vmatmul.f32.gmra.mxu0 %v456
    %v458 = vpop.f32.mrf.mxu0
    %v459 = vadd.f32 %v341, %v458
    %v460 = vand.u32 %v38, 4294901760
    %v461 = vsub.f32 %v38, %v460
    %462 = vmatmul.f32.gmra.mxu0 %v461
    %v463 = vpop.f32.mrf.mxu0
    %v464 = vadd.f32 %v345, %v463
    %v465 = vand.u32 %v39, 4294901760
    %v466 = vsub.f32 %v39, %v465
    %467 = vmatmul.f32.gmra.mxu0 %v466
    %v468 = vpop.f32.mrf.mxu0
    %v469 = vadd.f32 %v349, %v468
    %v470 = vand.u32 %v40, 4294901760
    %v471 = vsub.f32 %v40, %v470
    %472 = vmatmul.f32.gmra.mxu0 %v471
    %v473 = vpop.f32.mrf.mxu0
    %v474 = vadd.f32 %v353, %v473
    %v475 = vand.u32 %v41, 4294901760
    %v476 = vsub.f32 %v41, %v475
    %477 = vmatmul.f32.gmra.mxu0 %v476
    %v478 = vpop.f32.mrf.mxu0
    %v479 = vadd.f32 %v357, %v478
    %v480 = vand.u32 %v42, 4294901760
    %v481 = vsub.f32 %v42, %v480
    %482 = vmatmul.f32.gmra.mxu0 %v481
    %v483 = vpop.f32.mrf.mxu0
    %v484 = vadd.f32 %v361, %v483
    %v485 = vand.u32 %v43, 4294901760
    %v486 = vsub.f32 %v43, %v485
    %487 = vmatmul.f32.gmra.mxu0 %v486
    %v488 = vpop.f32.mrf.mxu0
    %v489 = vadd.f32 %v365, %v488
    %v490 = vand.u32 %v44, 4294901760
    %v491 = vsub.f32 %v44, %v490
    %492 = vmatmul.f32.gmra.mxu0 %v491
    %v493 = vpop.f32.mrf.mxu0
    %v494 = vadd.f32 %v369, %v493
    %v495 = vand.u32 %v45, 4294901760
    %v496 = vsub.f32 %v45, %v495
    %497 = vmatmul.f32.gmra.mxu0 %v496
    %v498 = vpop.f32.mrf.mxu0
    %v499 = vadd.f32 %v373, %v498
    %v500 = vand.u32 %v46, 4294901760
    %v501 = vsub.f32 %v46, %v500
    %502 = vmatmul.f32.gmra.mxu0 %v501
    %v503 = vpop.f32.mrf.mxu0
    %v504 = vadd.f32 %v377, %v503
    %v505 = vand.u32 %v47, 4294901760
    %v506 = vsub.f32 %v47, %v505
    %507 = vmatmul.f32.gmra.mxu0 %v506
    %v508 = vpop.f32.mrf.mxu0
    %v509 = vadd.f32 %v381, %v508
    %v510 = vand.u32 %v48, 4294901760
    %v511 = vsub.f32 %v48, %v510
    %512 = vmatmul.f32.gmra.mxu0 %v511
    %v513 = vpop.f32.mrf.mxu0
    %v514 = vadd.f32 %v385, %v513
    %515 = vdwg.mxu0
    %v516 = vand.u32 %v64, 4294901760
    %517 = vmatpush.msra.mxu0 %v516
    %v518 = vand.u32 %v63, 4294901760
    %519 = vmatpush.msra.mxu0 %v518
    %v520 = vand.u32 %v62, 4294901760
    %521 = vmatpush.msra.mxu0 %v520
    %v522 = vand.u32 %v61, 4294901760
    %523 = vmatpush.msra.mxu0 %v522
    %v524 = vand.u32 %v60, 4294901760
    %525 = vmatpush.msra.mxu0 %v524
    %v526 = vand.u32 %v59, 4294901760
    %527 = vmatpush.msra.mxu0 %v526
    %v528 = vand.u32 %v58, 4294901760
    %529 = vmatpush.msra.mxu0 %v528
    %v530 = vand.u32 %v57, 4294901760
    %531 = vmatpush.msra.mxu0 %v530
    %v532 = vand.u32 %v56, 4294901760
    %533 = vmatpush.msra.mxu0 %v532
    %v534 = vand.u32 %v55, 4294901760
    %535 = vmatpush.msra.mxu0 %v534
    %v536 = vand.u32 %v54, 4294901760
    %537 = vmatpush.msra.mxu0 %v536
    %v538 = vand.u32 %v53, 4294901760
    %539 = vmatpush.msra.mxu0 %v538
    %v540 = vand.u32 %v52, 4294901760
    %541 = vmatpush.msra.mxu0 %v540
    %v542 = vand.u32 %v51, 4294901760
    %543 = vmatpush.msra.mxu0 %v542
    %v544 = vand.u32 %v50, 4294901760
    %545 = vmatpush.msra.mxu0 %v544
    %v546 = vand.u32 %v49, 4294901760
    %547 = vmatpush.msra.mxu0 %v546
    %v548 = vand.u32 %v33, 4294901760
    %v549 = vsub.f32 %v33, %v548
    %v550 = vand.u32 %v549, 4294901760
    %551 = vmatmul.f32.gmra.mxu0 %v550
    %v552 = vpop.f32.mrf.mxu0
    %v553 = vadd.f32 %v439, %v552
    %v554 = vand.u32 %v34, 4294901760
    %v555 = vsub.f32 %v34, %v554
    %v556 = vand.u32 %v555, 4294901760
    %557 = vmatmul.f32.gmra.mxu0 %v556
    %v558 = vpop.f32.mrf.mxu0
    %v559 = vadd.f32 %v444, %v558
    %v560 = vand.u32 %v35, 4294901760
    %v561 = vsub.f32 %v35, %v560
    %v562 = vand.u32 %v561, 4294901760
    %563 = vmatmul.f32.gmra.mxu0 %v562
    %v564 = vpop.f32.mrf.mxu0
    %v565 = vadd.f32 %v449, %v564
    %v566 = vand.u32 %v36, 4294901760
    %v567 = vsub.f32 %v36, %v566
    %v568 = vand.u32 %v567, 4294901760
    %569 = vmatmul.f32.gmra.mxu0 %v568
    %v570 = vpop.f32.mrf.mxu0
    %v571 = vadd.f32 %v454, %v570
    %v572 = vand.u32 %v37, 4294901760
    %v573 = vsub.f32 %v37, %v572
    %v574 = vand.u32 %v573, 4294901760
    %575 = vmatmul.f32.gmra.mxu0 %v574
    %v576 = vpop.f32.mrf.mxu0
    %v577 = vadd.f32 %v459, %v576
    %v578 = vand.u32 %v38, 4294901760
    %v579 = vsub.f32 %v38, %v578
    %v580 = vand.u32 %v579, 4294901760
    %581 = vmatmul.f32.gmra.mxu0 %v580
    %v582 = vpop.f32.mrf.mxu0
    %v583 = vadd.f32 %v464, %v582
    %v584 = vand.u32 %v39, 4294901760
    %v585 = vsub.f32 %v39, %v584
    %v586 = vand.u32 %v585, 4294901760
    %587 = vmatmul.f32.gmra.mxu0 %v586
    %v588 = vpop.f32.mrf.mxu0
    %v589 = vadd.f32 %v469, %v588
    %v590 = vand.u32 %v40, 4294901760
    %v591 = vsub.f32 %v40, %v590
    %v592 = vand.u32 %v591, 4294901760
    %593 = vmatmul.f32.gmra.mxu0 %v592
    %v594 = vpop.f32.mrf.mxu0
    %v595 = vadd.f32 %v474, %v594
    %v596 = vand.u32 %v41, 4294901760
    %v597 = vsub.f32 %v41, %v596
    %v598 = vand.u32 %v597, 4294901760
    %599 = vmatmul.f32.gmra.mxu0 %v598
    %v600 = vpop.f32.mrf.mxu0
    %v601 = vadd.f32 %v479, %v600
    %v602 = vand.u32 %v42, 4294901760
    %v603 = vsub.f32 %v42, %v602
    %v604 = vand.u32 %v603, 4294901760
    %605 = vmatmul.f32.gmra.mxu0 %v604
    %v606 = vpop.f32.mrf.mxu0
    %v607 = vadd.f32 %v484, %v606
    %v608 = vand.u32 %v43, 4294901760
    %v609 = vsub.f32 %v43, %v608
    %v610 = vand.u32 %v609, 4294901760
    %611 = vmatmul.f32.gmra.mxu0 %v610
    %v612 = vpop.f32.mrf.mxu0
    %v613 = vadd.f32 %v489, %v612
    %v614 = vand.u32 %v44, 4294901760
    %v615 = vsub.f32 %v44, %v614
    %v616 = vand.u32 %v615, 4294901760
    %617 = vmatmul.f32.gmra.mxu0 %v616
    %v618 = vpop.f32.mrf.mxu0
    %v619 = vadd.f32 %v494, %v618
    %v620 = vand.u32 %v45, 4294901760
    %v621 = vsub.f32 %v45, %v620
    %v622 = vand.u32 %v621, 4294901760
    %623 = vmatmul.f32.gmra.mxu0 %v622
    %v624 = vpop.f32.mrf.mxu0
    %v625 = vadd.f32 %v499, %v624
    %v626 = vand.u32 %v46, 4294901760
    %v627 = vsub.f32 %v46, %v626
    %v628 = vand.u32 %v627, 4294901760
    %629 = vmatmul.f32.gmra.mxu0 %v628
    %v630 = vpop.f32.mrf.mxu0
    %v631 = vadd.f32 %v504, %v630
    %v632 = vand.u32 %v47, 4294901760
    %v633 = vsub.f32 %v47, %v632
    %v634 = vand.u32 %v633, 4294901760
    %635 = vmatmul.f32.gmra.mxu0 %v634
    %v636 = vpop.f32.mrf.mxu0
    %v637 = vadd.f32 %v509, %v636
    %v638 = vand.u32 %v48, 4294901760
    %v639 = vsub.f32 %v48, %v638
    %v640 = vand.u32 %v639, 4294901760
    %641 = vmatmul.f32.gmra.mxu0 %v640
    %v642 = vpop.f32.mrf.mxu0
    %v643 = vadd.f32 %v514, %v642
    %644 = vdwg.mxu0
    %v645 = vand.u32 %v64, 4294901760
    %v646 = vsub.f32 %v64, %v645
    %v647 = vand.u32 %v646, 4294901760
    %648 = vmatpush.msra.mxu0 %v647
    %v649 = vand.u32 %v63, 4294901760
    %v650 = vsub.f32 %v63, %v649
    %v651 = vand.u32 %v650, 4294901760
    %652 = vmatpush.msra.mxu0 %v651
    %v653 = vand.u32 %v62, 4294901760
    %v654 = vsub.f32 %v62, %v653
    %v655 = vand.u32 %v654, 4294901760
    %656 = vmatpush.msra.mxu0 %v655
    %v657 = vand.u32 %v61, 4294901760
    %v658 = vsub.f32 %v61, %v657
    %v659 = vand.u32 %v658, 4294901760
    %660 = vmatpush.msra.mxu0 %v659
    %v661 = vand.u32 %v60, 4294901760
    %v662 = vsub.f32 %v60, %v661
    %v663 = vand.u32 %v662, 4294901760
    %664 = vmatpush.msra.mxu0 %v663
    %v665 = vand.u32 %v59, 4294901760
    %v666 = vsub.f32 %v59, %v665
    %v667 = vand.u32 %v666, 4294901760
    %668 = vmatpush.msra.mxu0 %v667
    %v669 = vand.u32 %v58, 4294901760
    %v670 = vsub.f32 %v58, %v669
    %v671 = vand.u32 %v670, 4294901760
    %672 = vmatpush.msra.mxu0 %v671
    %v673 = vand.u32 %v57, 4294901760
    %v674 = vsub.f32 %v57, %v673
    %v675 = vand.u32 %v674, 4294901760
    %676 = vmatpush.msra.mxu0 %v675
    %v677 = vand.u32 %v56, 4294901760
    %v678 = vsub.f32 %v56, %v677
    %v679 = vand.u32 %v678, 4294901760
    %680 = vmatpush.msra.mxu0 %v679
    %v681 = vand.u32 %v55, 4294901760
    %v682 = vsub.f32 %v55, %v681
    %v683 = vand.u32 %v682, 4294901760
    %684 = vmatpush.msra.mxu0 %v683
    %v685 = vand.u32 %v54, 4294901760
    %v686 = vsub.f32 %v54, %v685
    %v687 = vand.u32 %v686, 4294901760
    %688 = vmatpush.msra.mxu0 %v687
    %v689 = vand.u32 %v53, 4294901760
    %v690 = vsub.f32 %v53, %v689
    %v691 = vand.u32 %v690, 4294901760
    %692 = vmatpush.msra.mxu0 %v691
    %v693 = vand.u32 %v52, 4294901760
    %v694 = vsub.f32 %v52, %v693
    %v695 = vand.u32 %v694, 4294901760
    %696 = vmatpush.msra.mxu0 %v695
    %v697 = vand.u32 %v51, 4294901760
    %v698 = vsub.f32 %v51, %v697
    %v699 = vand.u32 %v698, 4294901760
    %700 = vmatpush.msra.mxu0 %v699
    %v701 = vand.u32 %v50, 4294901760
    %v702 = vsub.f32 %v50, %v701
    %v703 = vand.u32 %v702, 4294901760
    %704 = vmatpush.msra.mxu0 %v703
    %v705 = vand.u32 %v49, 4294901760
    %v706 = vsub.f32 %v49, %v705
    %v707 = vand.u32 %v706, 4294901760
    %708 = vmatpush.msra.mxu0 %v707
    %v709 = vand.u32 %v33, 4294901760
    %710 = vmatmul.f32.gmra.mxu0 %v709
    %v711 = vpop.f32.mrf.mxu0
    %v712 = vadd.f32 %v553, %v711
    %v713 = vand.u32 %v34, 4294901760
    %714 = vmatmul.f32.gmra.mxu0 %v713
    %v715 = vpop.f32.mrf.mxu0
    %v716 = vadd.f32 %v559, %v715
    %v717 = vand.u32 %v35, 4294901760
    %718 = vmatmul.f32.gmra.mxu0 %v717
    %v719 = vpop.f32.mrf.mxu0
    %v720 = vadd.f32 %v565, %v719
    %v721 = vand.u32 %v36, 4294901760
    %722 = vmatmul.f32.gmra.mxu0 %v721
    %v723 = vpop.f32.mrf.mxu0
    %v724 = vadd.f32 %v571, %v723
    %v725 = vand.u32 %v37, 4294901760
    %726 = vmatmul.f32.gmra.mxu0 %v725
    %v727 = vpop.f32.mrf.mxu0
    %v728 = vadd.f32 %v577, %v727
    %v729 = vand.u32 %v38, 4294901760
    %730 = vmatmul.f32.gmra.mxu0 %v729
    %v731 = vpop.f32.mrf.mxu0
    %v732 = vadd.f32 %v583, %v731
    %v733 = vand.u32 %v39, 4294901760
    %734 = vmatmul.f32.gmra.mxu0 %v733
    %v735 = vpop.f32.mrf.mxu0
    %v736 = vadd.f32 %v589, %v735
    %v737 = vand.u32 %v40, 4294901760
    %738 = vmatmul.f32.gmra.mxu0 %v737
    %v739 = vpop.f32.mrf.mxu0
    %v740 = vadd.f32 %v595, %v739
    %v741 = vand.u32 %v41, 4294901760
    %742 = vmatmul.f32.gmra.mxu0 %v741
    %v743 = vpop.f32.mrf.mxu0
    %v744 = vadd.f32 %v601, %v743
    %v745 = vand.u32 %v42, 4294901760
    %746 = vmatmul.f32.gmra.mxu0 %v745
    %v747 = vpop.f32.mrf.mxu0
    %v748 = vadd.f32 %v607, %v747
    %v749 = vand.u32 %v43, 4294901760
    %750 = vmatmul.f32.gmra.mxu0 %v749
    %v751 = vpop.f32.mrf.mxu0
    %v752 = vadd.f32 %v613, %v751
    %v753 = vand.u32 %v44, 4294901760
    %754 = vmatmul.f32.gmra.mxu0 %v753
    %v755 = vpop.f32.mrf.mxu0
    %v756 = vadd.f32 %v619, %v755
    %v757 = vand.u32 %v45, 4294901760
    %758 = vmatmul.f32.gmra.mxu0 %v757
    %v759 = vpop.f32.mrf.mxu0
    %v760 = vadd.f32 %v625, %v759
    %v761 = vand.u32 %v46, 4294901760
    %762 = vmatmul.f32.gmra.mxu0 %v761
    %v763 = vpop.f32.mrf.mxu0
    %v764 = vadd.f32 %v631, %v763
    %v765 = vand.u32 %v47, 4294901760
    %766 = vmatmul.f32.gmra.mxu0 %v765
    %v767 = vpop.f32.mrf.mxu0
    %v768 = vadd.f32 %v637, %v767
    %v769 = vand.u32 %v48, 4294901760
    %770 = vmatmul.f32.gmra.mxu0 %v769
    %v771 = vpop.f32.mrf.mxu0
    %v772 = vadd.f32 %v643, %v771
    %773 = vdwg.mxu0
    %v774 = vand.u32 %v64, 4294901760
    %775 = vmatpush.msra.mxu0 %v774
    %v776 = vand.u32 %v63, 4294901760
    %777 = vmatpush.msra.mxu0 %v776
    %v778 = vand.u32 %v62, 4294901760
    %779 = vmatpush.msra.mxu0 %v778
    %v780 = vand.u32 %v61, 4294901760
    %781 = vmatpush.msra.mxu0 %v780
    %v782 = vand.u32 %v60, 4294901760
    %783 = vmatpush.msra.mxu0 %v782
    %v784 = vand.u32 %v59, 4294901760
    %785 = vmatpush.msra.mxu0 %v784
    %v786 = vand.u32 %v58, 4294901760
    %787 = vmatpush.msra.mxu0 %v786
    %v788 = vand.u32 %v57, 4294901760
    %789 = vmatpush.msra.mxu0 %v788
    %v790 = vand.u32 %v56, 4294901760
    %791 = vmatpush.msra.mxu0 %v790
    %v792 = vand.u32 %v55, 4294901760
    %793 = vmatpush.msra.mxu0 %v792
    %v794 = vand.u32 %v54, 4294901760
    %795 = vmatpush.msra.mxu0 %v794
    %v796 = vand.u32 %v53, 4294901760
    %797 = vmatpush.msra.mxu0 %v796
    %v798 = vand.u32 %v52, 4294901760
    %799 = vmatpush.msra.mxu0 %v798
    %v800 = vand.u32 %v51, 4294901760
    %801 = vmatpush.msra.mxu0 %v800
    %v802 = vand.u32 %v50, 4294901760
    %803 = vmatpush.msra.mxu0 %v802
    %v804 = vand.u32 %v49, 4294901760
    %805 = vmatpush.msra.mxu0 %v804
    %v806 = vand.u32 %v33, 4294901760
    %807 = vmatmul.f32.gmra.mxu0 %v806
    %v808 = vpop.f32.mrf.mxu0
    %v809 = vadd.f32 %v712, %v808
    %v810 = vand.u32 %v34, 4294901760
    %811 = vmatmul.f32.gmra.mxu0 %v810
    %v812 = vpop.f32.mrf.mxu0
    %v813 = vadd.f32 %v716, %v812
    %v814 = vand.u32 %v35, 4294901760
    %815 = vmatmul.f32.gmra.mxu0 %v814
    %v816 = vpop.f32.mrf.mxu0
    %v817 = vadd.f32 %v720, %v816
    %v818 = vand.u32 %v36, 4294901760
    %819 = vmatmul.f32.gmra.mxu0 %v818
    %v820 = vpop.f32.mrf.mxu0
    %v821 = vadd.f32 %v724, %v820
    %v822 = vand.u32 %v37, 4294901760
    %823 = vmatmul.f32.gmra.mxu0 %v822
    %v824 = vpop.f32.mrf.mxu0
    %v825 = vadd.f32 %v728, %v824
    %v826 = vand.u32 %v38, 4294901760
    %827 = vmatmul.f32.gmra.mxu0 %v826
    %v828 = vpop.f32.mrf.mxu0
    %v829 = vadd.f32 %v732, %v828
    %v830 = vand.u32 %v39, 4294901760
    %831 = vmatmul.f32.gmra.mxu0 %v830
    %v832 = vpop.f32.mrf.mxu0
    %v833 = vadd.f32 %v736, %v832
    %v834 = vand.u32 %v40, 4294901760
    %835 = vmatmul.f32.gmra.mxu0 %v834
    %v836 = vpop.f32.mrf.mxu0
    %v837 = vadd.f32 %v740, %v836
    %v838 = vand.u32 %v41, 4294901760
    %839 = vmatmul.f32.gmra.mxu0 %v838
    %v840 = vpop.f32.mrf.mxu0
    %v841 = vadd.f32 %v744, %v840
    %v842 = vand.u32 %v42, 4294901760
    %843 = vmatmul.f32.gmra.mxu0 %v842
    %v844 = vpop.f32.mrf.mxu0
    %v845 = vadd.f32 %v748, %v844
    %v846 = vand.u32 %v43, 4294901760
    %847 = vmatmul.f32.gmra.mxu0 %v846
    %v848 = vpop.f32.mrf.mxu0
    %v849 = vadd.f32 %v752, %v848
    %v850 = vand.u32 %v44, 4294901760
    %851 = vmatmul.f32.gmra.mxu0 %v850
    %v852 = vpop.f32.mrf.mxu0
    %v853 = vadd.f32 %v756, %v852
    %v854 = vand.u32 %v45, 4294901760
    %855 = vmatmul.f32.gmra.mxu0 %v854
    %v856 = vpop.f32.mrf.mxu0
    %v857 = vadd.f32 %v760, %v856
    %v858 = vand.u32 %v46, 4294901760
    %859 = vmatmul.f32.gmra.mxu0 %v858
    %v860 = vpop.f32.mrf.mxu0
    %v861 = vadd.f32 %v764, %v860
    %v862 = vand.u32 %v47, 4294901760
    %863 = vmatmul.f32.gmra.mxu0 %v862
    %v864 = vpop.f32.mrf.mxu0
    %v865 = vadd.f32 %v768, %v864
    %v866 = vand.u32 %v48, 4294901760
    %867 = vmatmul.f32.gmra.mxu0 %v866
    %v868 = vpop.f32.mrf.mxu0
    %v869 = vadd.f32 %v772, %v868
    %870 = vdwg.mxu0
    %871 = vst [vmem:[#allocation5] sm:$0xff] %v809
    %872 = vst [vmem:[#allocation5 + $0x8] sm:$0xff] %v813
    %873 = vst [vmem:[#allocation5 + $0x10] sm:$0xff] %v817
    %874 = vst [vmem:[#allocation5 + $0x18] sm:$0xff] %v821
    %875 = vst [vmem:[#allocation5 + $0x20] sm:$0xff] %v825
    %876 = vst [vmem:[#allocation5 + $0x28] sm:$0xff] %v829
    %877 = vst [vmem:[#allocation5 + $0x30] sm:$0xff] %v833
    %878 = vst [vmem:[#allocation5 + $0x38] sm:$0xff] %v837
    %879 = vst [vmem:[#allocation5 + $0x40] sm:$0xff] %v841
    %880 = vst [vmem:[#allocation5 + $0x48] sm:$0xff] %v845
    %881 = vst [vmem:[#allocation5 + $0x50] sm:$0xff] %v849
    %882 = vst [vmem:[#allocation5 + $0x58] sm:$0xff] %v853
    %883 = vst [vmem:[#allocation5 + $0x60] sm:$0xff] %v857
    %884 = vst [vmem:[#allocation5 + $0x68] sm:$0xff] %v861
    %885 = vst [vmem:[#allocation5 + $0x70] sm:$0xff] %v865
    %886 = vst [vmem:[#allocation5 + $0x78] sm:$0xff] %v869
    %v887 = vld [vmem:[%s2] sm:$0xff]
    %v888 = vld [vmem:[%s2 + $0x8] sm:$0xff]
    %v889 = vld [vmem:[%s2 + $0x10] sm:$0xff]
    %v890 = vld [vmem:[%s2 + $0x18] sm:$0xff]
    %v891 = vld [vmem:[%s2 + $0x20] sm:$0xff]
    %v892 = vld [vmem:[%s2 + $0x28] sm:$0xff]
    %v893 = vld [vmem:[%s2 + $0x30] sm:$0xff]
    %v894 = vld [vmem:[%s2 + $0x38] sm:$0xff]
    %v895 = vld [vmem:[%s2 + $0x40] sm:$0xff]
    %v896 = vld [vmem:[%s2 + $0x48] sm:$0xff]
    %v897 = vld [vmem:[%s2 + $0x50] sm:$0xff]
    %v898 = vld [vmem:[%s2 + $0x58] sm:$0xff]
    %v899 = vld [vmem:[%s2 + $0x60] sm:$0xff]
    %v900 = vld [vmem:[%s2 + $0x68] sm:$0xff]
    %v901 = vld [vmem:[%s2 + $0x70] sm:$0xff]
    %v902 = vld [vmem:[%s2 + $0x78] sm:$0xff]
    %v903 = vand.u32 %v902, 4294901760
    %904 = vmatpush.msra.mxu0 %v903
    %v905 = vand.u32 %v901, 4294901760
    %906 = vmatpush.msra.mxu0 %v905
    %v907 = vand.u32 %v900, 4294901760
    %908 = vmatpush.msra.mxu0 %v907
    %v909 = vand.u32 %v899, 4294901760
    %910 = vmatpush.msra.mxu0 %v909
    %v911 = vand.u32 %v898, 4294901760
    %912 = vmatpush.msra.mxu0 %v911
    %v913 = vand.u32 %v897, 4294901760
    %914 = vmatpush.msra.mxu0 %v913
    %v915 = vand.u32 %v896, 4294901760
    %916 = vmatpush.msra.mxu0 %v915
    %v917 = vand.u32 %v895, 4294901760
    %918 = vmatpush.msra.mxu0 %v917
    %v919 = vand.u32 %v894, 4294901760
    %920 = vmatpush.msra.mxu0 %v919
    %v921 = vand.u32 %v893, 4294901760
    %922 = vmatpush.msra.mxu0 %v921
    %v923 = vand.u32 %v892, 4294901760
    %924 = vmatpush.msra.mxu0 %v923
    %v925 = vand.u32 %v891, 4294901760
    %926 = vmatpush.msra.mxu0 %v925
    %v927 = vand.u32 %v890, 4294901760
    %928 = vmatpush.msra.mxu0 %v927
    %v929 = vand.u32 %v889, 4294901760
    %930 = vmatpush.msra.mxu0 %v929
    %v931 = vand.u32 %v888, 4294901760
    %932 = vmatpush.msra.mxu0 %v931
    %v933 = vand.u32 %v887, 4294901760
    %934 = vmatpush.msra.mxu0 %v933
    %v935 = vand.u32 %v809, 4294901760
    %v936 = vsub.f32 %v809, %v935
    %v937 = vand.u32 %v936, 4294901760
    %v938 = vsub.f32 %v936, %v937
    %v939 = vand.u32 %v938, 4294901760
    %940 = vmatmul.f32.gmra.mxu0 %v939
    %v941 = vpop.f32.mrf.mxu0
    %v942 = vadd.f32 0.0, %v941
    %v943 = vand.u32 %v813, 4294901760
    %v944 = vsub.f32 %v813, %v943
    %v945 = vand.u32 %v944, 4294901760
    %v946 = vsub.f32 %v944, %v945
    %v947 = vand.u32 %v946, 4294901760
    %948 = vmatmul.f32.gmra.mxu0 %v947
    %v949 = vpop.f32.mrf.mxu0
    %v950 = vadd.f32 0.0, %v949
    %v951 = vand.u32 %v817, 4294901760
    %v952 = vsub.f32 %v817, %v951
    %v953 = vand.u32 %v952, 4294901760
    %v954 = vsub.f32 %v952, %v953
    %v955 = vand.u32 %v954, 4294901760
    %956 = vmatmul.f32.gmra.mxu0 %v955
    %v957 = vpop.f32.mrf.mxu0
    %v958 = vadd.f32 0.0, %v957
    %v959 = vand.u32 %v821, 4294901760
    %v960 = vsub.f32 %v821, %v959
    %v961 = vand.u32 %v960, 4294901760
    %v962 = vsub.f32 %v960, %v961
    %v963 = vand.u32 %v962, 4294901760
    %964 = vmatmul.f32.gmra.mxu0 %v963
    %v965 = vpop.f32.mrf.mxu0
    %v966 = vadd.f32 0.0, %v965
    %v967 = vand.u32 %v825, 4294901760
    %v968 = vsub.f32 %v825, %v967
    %v969 = vand.u32 %v968, 4294901760
    %v970 = vsub.f32 %v968, %v969
    %v971 = vand.u32 %v970, 4294901760
    %972 = vmatmul.f32.gmra.mxu0 %v971
    %v973 = vpop.f32.mrf.mxu0
    %v974 = vadd.f32 0.0, %v973
    %v975 = vand.u32 %v829, 4294901760
    %v976 = vsub.f32 %v829, %v975
    %v977 = vand.u32 %v976, 4294901760
    %v978 = vsub.f32 %v976, %v977
    %v979 = vand.u32 %v978, 4294901760
    %980 = vmatmul.f32.gmra.mxu0 %v979
    %v981 = vpop.f32.mrf.mxu0
    %v982 = vadd.f32 0.0, %v981
    %v983 = vand.u32 %v833, 4294901760
    %v984 = vsub.f32 %v833, %v983
    %v985 = vand.u32 %v984, 4294901760
    %v986 = vsub.f32 %v984, %v985
    %v987 = vand.u32 %v986, 4294901760
    %988 = vmatmul.f32.gmra.mxu0 %v987
    %v989 = vpop.f32.mrf.mxu0
    %v990 = vadd.f32 0.0, %v989
    %v991 = vand.u32 %v837, 4294901760
    %v992 = vsub.f32 %v837, %v991
    %v993 = vand.u32 %v992, 4294901760
    %v994 = vsub.f32 %v992, %v993
    %v995 = vand.u32 %v994, 4294901760
    %996 = vmatmul.f32.gmra.mxu0 %v995
    %v997 = vpop.f32.mrf.mxu0
    %v998 = vadd.f32 0.0, %v997
    %v999 = vand.u32 %v841, 4294901760
    %v1000 = vsub.f32 %v841, %v999
    %v1001 = vand.u32 %v1000, 4294901760
    %v1002 = vsub.f32 %v1000, %v1001
    %v1003 = vand.u32 %v1002, 4294901760
    %1004 = vmatmul.f32.gmra.mxu0 %v1003
    %v1005 = vpop.f32.mrf.mxu0
    %v1006 = vadd.f32 0.0, %v1005
    %v1007 = vand.u32 %v845, 4294901760
    %v1008 = vsub.f32 %v845, %v1007
    %v1009 = vand.u32 %v1008, 4294901760
    %v1010 = vsub.f32 %v1008, %v1009
    %v1011 = vand.u32 %v1010, 4294901760
    %1012 = vmatmul.f32.gmra.mxu0 %v1011
    %v1013 = vpop.f32.mrf.mxu0
    %v1014 = vadd.f32 0.0, %v1013
    %v1015 = vand.u32 %v849, 4294901760
    %v1016 = vsub.f32 %v849, %v1015
    %v1017 = vand.u32 %v1016, 4294901760
    %v1018 = vsub.f32 %v1016, %v1017
    %v1019 = vand.u32 %v1018, 4294901760
    %1020 = vmatmul.f32.gmra.mxu0 %v1019
    %v1021 = vpop.f32.mrf.mxu0
    %v1022 = vadd.f32 0.0, %v1021
    %v1023 = vand.u32 %v853, 4294901760
    %v1024 = vsub.f32 %v853, %v1023
    %v1025 = vand.u32 %v1024, 4294901760
    %v1026 = vsub.f32 %v1024, %v1025
    %v1027 = vand.u32 %v1026, 4294901760
    %1028 = vmatmul.f32.gmra.mxu0 %v1027
    %v1029 = vpop.f32.mrf.mxu0
    %v1030 = vadd.f32 0.0, %v1029
    %v1031 = vand.u32 %v857, 4294901760
    %v1032 = vsub.f32 %v857, %v1031
    %v1033 = vand.u32 %v1032, 4294901760
    %v1034 = vsub.f32 %v1032, %v1033
    %v1035 = vand.u32 %v1034, 4294901760
    %1036 = vmatmul.f32.gmra.mxu0 %v1035
    %v1037 = vpop.f32.mrf.mxu0
    %v1038 = vadd.f32 0.0, %v1037
    %v1039 = vand.u32 %v861, 4294901760
    %v1040 = vsub.f32 %v861, %v1039
    %v1041 = vand.u32 %v1040, 4294901760
    %v1042 = vsub.f32 %v1040, %v1041
    %v1043 = vand.u32 %v1042, 4294901760
    %1044 = vmatmul.f32.gmra.mxu0 %v1043
    %v1045 = vpop.f32.mrf.mxu0
    %v1046 = vadd.f32 0.0, %v1045
    %v1047 = vand.u32 %v865, 4294901760
    %v1048 = vsub.f32 %v865, %v1047
    %v1049 = vand.u32 %v1048, 4294901760
    %v1050 = vsub.f32 %v1048, %v1049
    %v1051 = vand.u32 %v1050, 4294901760
    %1052 = vmatmul.f32.gmra.mxu0 %v1051
    %v1053 = vpop.f32.mrf.mxu0
    %v1054 = vadd.f32 0.0, %v1053
    %v1055 = vand.u32 %v869, 4294901760
    %v1056 = vsub.f32 %v869, %v1055
    %v1057 = vand.u32 %v1056, 4294901760
    %v1058 = vsub.f32 %v1056, %v1057
    %v1059 = vand.u32 %v1058, 4294901760
    %1060 = vmatmul.f32.gmra.mxu0 %v1059
    %v1061 = vpop.f32.mrf.mxu0
    %v1062 = vadd.f32 0.0, %v1061
    %1063 = vdwg.mxu0
    %v1064 = vand.u32 %v902, 4294901760
    %v1065 = vsub.f32 %v902, %v1064
    %v1066 = vand.u32 %v1065, 4294901760
    %v1067 = vsub.f32 %v1065, %v1066
    %v1068 = vand.u32 %v1067, 4294901760
    %1069 = vmatpush.msra.mxu0 %v1068
    %v1070 = vand.u32 %v901, 4294901760
    %v1071 = vsub.f32 %v901, %v1070
    %v1072 = vand.u32 %v1071, 4294901760
    %v1073 = vsub.f32 %v1071, %v1072
    %v1074 = vand.u32 %v1073, 4294901760
    %1075 = vmatpush.msra.mxu0 %v1074
    %v1076 = vand.u32 %v900, 4294901760
    %v1077 = vsub.f32 %v900, %v1076
    %v1078 = vand.u32 %v1077, 4294901760
    %v1079 = vsub.f32 %v1077, %v1078
    %v1080 = vand.u32 %v1079, 4294901760
    %1081 = vmatpush.msra.mxu0 %v1080
    %v1082 = vand.u32 %v899, 4294901760
    %v1083 = vsub.f32 %v899, %v1082
    %v1084 = vand.u32 %v1083, 4294901760
    %v1085 = vsub.f32 %v1083, %v1084
    %v1086 = vand.u32 %v1085, 4294901760
    %1087 = vmatpush.msra.mxu0 %v1086
    %v1088 = vand.u32 %v898, 4294901760
    %v1089 = vsub.f32 %v898, %v1088
    %v1090 = vand.u32 %v1089, 4294901760
    %v1091 = vsub.f32 %v1089, %v1090
    %v1092 = vand.u32 %v1091, 4294901760
    %1093 = vmatpush.msra.mxu0 %v1092
    %v1094 = vand.u32 %v897, 4294901760
    %v1095 = vsub.f32 %v897, %v1094
    %v1096 = vand.u32 %v1095, 4294901760
    %v1097 = vsub.f32 %v1095, %v1096
    %v1098 = vand.u32 %v1097, 4294901760
    %1099 = vmatpush.msra.mxu0 %v1098
    %v1100 = vand.u32 %v896, 4294901760
    %v1101 = vsub.f32 %v896, %v1100
    %v1102 = vand.u32 %v1101, 4294901760
    %v1103 = vsub.f32 %v1101, %v1102
    %v1104 = vand.u32 %v1103, 4294901760
    %1105 = vmatpush.msra.mxu0 %v1104
    %v1106 = vand.u32 %v895, 4294901760
    %v1107 = vsub.f32 %v895, %v1106
    %v1108 = vand.u32 %v1107, 4294901760
    %v1109 = vsub.f32 %v1107, %v1108
    %v1110 = vand.u32 %v1109, 4294901760
    %1111 = vmatpush.msra.mxu0 %v1110
    %v1112 = vand.u32 %v894, 4294901760
    %v1113 = vsub.f32 %v894, %v1112
    %v1114 = vand.u32 %v1113, 4294901760
    %v1115 = vsub.f32 %v1113, %v1114
    %v1116 = vand.u32 %v1115, 4294901760
    %1117 = vmatpush.msra.mxu0 %v1116
    %v1118 = vand.u32 %v893, 4294901760
    %v1119 = vsub.f32 %v893, %v1118
    %v1120 = vand.u32 %v1119, 4294901760
    %v1121 = vsub.f32 %v1119, %v1120
    %v1122 = vand.u32 %v1121, 4294901760
    %1123 = vmatpush.msra.mxu0 %v1122
    %v1124 = vand.u32 %v892, 4294901760
    %v1125 = vsub.f32 %v892, %v1124
    %v1126 = vand.u32 %v1125, 4294901760
    %v1127 = vsub.f32 %v1125, %v1126
    %v1128 = vand.u32 %v1127, 4294901760
    %1129 = vmatpush.msra.mxu0 %v1128
    %v1130 = vand.u32 %v891, 4294901760
    %v1131 = vsub.f32 %v891, %v1130
    %v1132 = vand.u32 %v1131, 4294901760
    %v1133 = vsub.f32 %v1131, %v1132
    %v1134 = vand.u32 %v1133, 4294901760
    %1135 = vmatpush.msra.mxu0 %v1134
    %v1136 = vand.u32 %v890, 4294901760
    %v1137 = vsub.f32 %v890, %v1136
    %v1138 = vand.u32 %v1137, 4294901760
    %v1139 = vsub.f32 %v1137, %v1138
    %v1140 = vand.u32 %v1139, 4294901760
    %1141 = vmatpush.msra.mxu0 %v1140
    %v1142 = vand.u32 %v889, 4294901760
    %v1143 = vsub.f32 %v889, %v1142
    %v1144 = vand.u32 %v1143, 4294901760
    %v1145 = vsub.f32 %v1143, %v1144
    %v1146 = vand.u32 %v1145, 4294901760
    %1147 = vmatpush.msra.mxu0 %v1146
    %v1148 = vand.u32 %v888, 4294901760
    %v1149 = vsub.f32 %v888, %v1148
    %v1150 = vand.u32 %v1149, 4294901760
    %v1151 = vsub.f32 %v1149, %v1150
    %v1152 = vand.u32 %v1151, 4294901760
    %1153 = vmatpush.msra.mxu0 %v1152
    %v1154 = vand.u32 %v887, 4294901760
    %v1155 = vsub.f32 %v887, %v1154
    %v1156 = vand.u32 %v1155, 4294901760
    %v1157 = vsub.f32 %v1155, %v1156
    %v1158 = vand.u32 %v1157, 4294901760
    %1159 = vmatpush.msra.mxu0 %v1158
    %v1160 = vand.u32 %v809, 4294901760
    %1161 = vmatmul.f32.gmra.mxu0 %v1160
    %v1162 = vpop.f32.mrf.mxu0
    %v1163 = vadd.f32 %v942, %v1162
    %v1164 = vand.u32 %v813, 4294901760
    %1165 = vmatmul.f32.gmra.mxu0 %v1164
    %v1166 = vpop.f32.mrf.mxu0
    %v1167 = vadd.f32 %v950, %v1166
    %v1168 = vand.u32 %v817, 4294901760
    %1169 = vmatmul.f32.gmra.mxu0 %v1168
    %v1170 = vpop.f32.mrf.mxu0
    %v1171 = vadd.f32 %v958, %v1170
    %v1172 = vand.u32 %v821, 4294901760
    %1173 = vmatmul.f32.gmra.mxu0 %v1172
    %v1174 = vpop.f32.mrf.mxu0
    %v1175 = vadd.f32 %v966, %v1174
    %v1176 = vand.u32 %v825, 4294901760
    %1177 = vmatmul.f32.gmra.mxu0 %v1176
    %v1178 = vpop.f32.mrf.mxu0
    %v1179 = vadd.f32 %v974, %v1178
    %v1180 = vand.u32 %v829, 4294901760
    %1181 = vmatmul.f32.gmra.mxu0 %v1180
    %v1182 = vpop.f32.mrf.mxu0
    %v1183 = vadd.f32 %v982, %v1182
    %v1184 = vand.u32 %v833, 4294901760
    %1185 = vmatmul.f32.gmra.mxu0 %v1184
    %v1186 = vpop.f32.mrf.mxu0
    %v1187 = vadd.f32 %v990, %v1186
    %v1188 = vand.u32 %v837, 4294901760
    %1189 = vmatmul.f32.gmra.mxu0 %v1188
    %v1190 = vpop.f32.mrf.mxu0
    %v1191 = vadd.f32 %v998, %v1190
    %v1192 = vand.u32 %v841, 4294901760
    %1193 = vmatmul.f32.gmra.mxu0 %v1192
    %v1194 = vpop.f32.mrf.mxu0
    %v1195 = vadd.f32 %v1006, %v1194
    %v1196 = vand.u32 %v845, 4294901760
    %1197 = vmatmul.f32.gmra.mxu0 %v1196
    %v1198 = vpop.f32.mrf.mxu0
    %v1199 = vadd.f32 %v1014, %v1198
    %v1200 = vand.u32 %v849, 4294901760
    %1201 = vmatmul.f32.gmra.mxu0 %v1200
    %v1202 = vpop.f32.mrf.mxu0
    %v1203 = vadd.f32 %v1022, %v1202
    %v1204 = vand.u32 %v853, 4294901760
    %1205 = vmatmul.f32.gmra.mxu0 %v1204
    %v1206 = vpop.f32.mrf.mxu0
    %v1207 = vadd.f32 %v1030, %v1206
    %v1208 = vand.u32 %v857, 4294901760
    %1209 = vmatmul.f32.gmra.mxu0 %v1208
    %v1210 = vpop.f32.mrf.mxu0
    %v1211 = vadd.f32 %v1038, %v1210
    %v1212 = vand.u32 %v861, 4294901760
    %1213 = vmatmul.f32.gmra.mxu0 %v1212
    %v1214 = vpop.f32.mrf.mxu0
    %v1215 = vadd.f32 %v1046, %v1214
    %v1216 = vand.u32 %v865, 4294901760
    %1217 = vmatmul.f32.gmra.mxu0 %v1216
    %v1218 = vpop.f32.mrf.mxu0
    %v1219 = vadd.f32 %v1054, %v1218
    %v1220 = vand.u32 %v869, 4294901760
    %1221 = vmatmul.f32.gmra.mxu0 %v1220
    %v1222 = vpop.f32.mrf.mxu0
    %v1223 = vadd.f32 %v1062, %v1222
    %1224 = vdwg.mxu0
    %v1225 = vand.u32 %v902, 4294901760
    %v1226 = vsub.f32 %v902, %v1225
    %1227 = vmatpush.msra.mxu0 %v1226
    %v1228 = vand.u32 %v901, 4294901760
    %v1229 = vsub.f32 %v901, %v1228
    %1230 = vmatpush.msra.mxu0 %v1229
    %v1231 = vand.u32 %v900, 4294901760
    %v1232 = vsub.f32 %v900, %v1231
    %1233 = vmatpush.msra.mxu0 %v1232
    %v1234 = vand.u32 %v899, 4294901760
    %v1235 = vsub.f32 %v899, %v1234
    %1236 = vmatpush.msra.mxu0 %v1235
    %v1237 = vand.u32 %v898, 4294901760
    %v1238 = vsub.f32 %v898, %v1237
    %1239 = vmatpush.msra.mxu0 %v1238
    %v1240 = vand.u32 %v897, 4294901760
    %v1241 = vsub.f32 %v897, %v1240
    %1242 = vmatpush.msra.mxu0 %v1241
    %v1243 = vand.u32 %v896, 4294901760
    %v1244 = vsub.f32 %v896, %v1243
    %1245 = vmatpush.msra.mxu0 %v1244
    %v1246 = vand.u32 %v895, 4294901760
    %v1247 = vsub.f32 %v895, %v1246
    %1248 = vmatpush.msra.mxu0 %v1247
    %v1249 = vand.u32 %v894, 4294901760
    %v1250 = vsub.f32 %v894, %v1249
    %1251 = vmatpush.msra.mxu0 %v1250
    %v1252 = vand.u32 %v893, 4294901760
    %v1253 = vsub.f32 %v893, %v1252
    %1254 = vmatpush.msra.mxu0 %v1253
    %v1255 = vand.u32 %v892, 4294901760
    %v1256 = vsub.f32 %v892, %v1255
    %1257 = vmatpush.msra.mxu0 %v1256
    %v1258 = vand.u32 %v891, 4294901760
    %v1259 = vsub.f32 %v891, %v1258
    %1260 = vmatpush.msra.mxu0 %v1259
    %v1261 = vand.u32 %v890, 4294901760
    %v1262 = vsub.f32 %v890, %v1261
    %1263 = vmatpush.msra.mxu0 %v1262
    %v1264 = vand.u32 %v889, 4294901760
    %v1265 = vsub.f32 %v889, %v1264
    %1266 = vmatpush.msra.mxu0 %v1265
    %v1267 = vand.u32 %v888, 4294901760
    %v1268 = vsub.f32 %v888, %v1267
    %1269 = vmatpush.msra.mxu0 %v1268
    %v1270 = vand.u32 %v887, 4294901760
    %v1271 = vsub.f32 %v887, %v1270
    %1272 = vmatpush.msra.mxu0 %v1271
    %v1273 = vand.u32 %v809, 4294901760
    %v1274 = vsub.f32 %v809, %v1273
    %1275 = vmatmul.f32.gmra.mxu0 %v1274
    %v1276 = vpop.f32.mrf.mxu0
    %v1277 = vadd.f32 %v1163, %v1276
    %v1278 = vand.u32 %v813, 4294901760
    %v1279 = vsub.f32 %v813, %v1278
    %1280 = vmatmul.f32.gmra.mxu0 %v1279
    %v1281 = vpop.f32.mrf.mxu0
    %v1282 = vadd.f32 %v1167, %v1281
    %v1283 = vand.u32 %v817, 4294901760
    %v1284 = vsub.f32 %v817, %v1283
    %1285 = vmatmul.f32.gmra.mxu0 %v1284
    %v1286 = vpop.f32.mrf.mxu0
    %v1287 = vadd.f32 %v1171, %v1286
    %v1288 = vand.u32 %v821, 4294901760
    %v1289 = vsub.f32 %v821, %v1288
    %1290 = vmatmul.f32.gmra.mxu0 %v1289
    %v1291 = vpop.f32.mrf.mxu0
    %v1292 = vadd.f32 %v1175, %v1291
    %v1293 = vand.u32 %v825, 4294901760
    %v1294 = vsub.f32 %v825, %v1293
    %1295 = vmatmul.f32.gmra.mxu0 %v1294
    %v1296 = vpop.f32.mrf.mxu0
    %v1297 = vadd.f32 %v1179, %v1296
    %v1298 = vand.u32 %v829, 4294901760
    %v1299 = vsub.f32 %v829, %v1298
    %1300 = vmatmul.f32.gmra.mxu0 %v1299
    %v1301 = vpop.f32.mrf.mxu0
    %v1302 = vadd.f32 %v1183, %v1301
    %v1303 = vand.u32 %v833, 4294901760
    %v1304 = vsub.f32 %v833, %v1303
    %1305 = vmatmul.f32.gmra.mxu0 %v1304
    %v1306 = vpop.f32.mrf.mxu0
    %v1307 = vadd.f32 %v1187, %v1306
    %v1308 = vand.u32 %v837, 4294901760
    %v1309 = vsub.f32 %v837, %v1308
    %1310 = vmatmul.f32.gmra.mxu0 %v1309
    %v1311 = vpop.f32.mrf.mxu0
    %v1312 = vadd.f32 %v1191, %v1311
    %v1313 = vand.u32 %v841, 4294901760
    %v1314 = vsub.f32 %v841, %v1313
    %1315 = vmatmul.f32.gmra.mxu0 %v1314
    %v1316 = vpop.f32.mrf.mxu0
    %v1317 = vadd.f32 %v1195, %v1316
    %v1318 = vand.u32 %v845, 4294901760
    %v1319 = vsub.f32 %v845, %v1318
    %1320 = vmatmul.f32.gmra.mxu0 %v1319
    %v1321 = vpop.f32.mrf.mxu0
    %v1322 = vadd.f32 %v1199, %v1321
    %v1323 = vand.u32 %v849, 4294901760
    %v1324 = vsub.f32 %v849, %v1323
    %1325 = vmatmul.f32.gmra.mxu0 %v1324
    %v1326 = vpop.f32.mrf.mxu0
    %v1327 = vadd.f32 %v1203, %v1326
    %v1328 = vand.u32 %v853, 4294901760
    %v1329 = vsub.f32 %v853, %v1328
    %1330 = vmatmul.f32.gmra.mxu0 %v1329
    %v1331 = vpop.f32.mrf.mxu0
    %v1332 = vadd.f32 %v1207, %v1331
    %v1333 = vand.u32 %v857, 4294901760
    %v1334 = vsub.f32 %v857, %v1333
    %1335 = vmatmul.f32.gmra.mxu0 %v1334
    %v1336 = vpop.f32.mrf.mxu0
    %v1337 = vadd.f32 %v1211, %v1336
    %v1338 = vand.u32 %v861, 4294901760
    %v1339 = vsub.f32 %v861, %v1338
    %1340 = vmatmul.f32.gmra.mxu0 %v1339
    %v1341 = vpop.f32.mrf.mxu0
    %v1342 = vadd.f32 %v1215, %v1341
    %v1343 = vand.u32 %v865, 4294901760
    %v1344 = vsub.f32 %v865, %v1343
    %1345 = vmatmul.f32.gmra.mxu0 %v1344
    %v1346 = vpop.f32.mrf.mxu0
    %v1347 = vadd.f32 %v1219, %v1346
    %v1348 = vand.u32 %v869, 4294901760
    %v1349 = vsub.f32 %v869, %v1348
    %1350 = vmatmul.f32.gmra.mxu0 %v1349
    %v1351 = vpop.f32.mrf.mxu0
    %v1352 = vadd.f32 %v1223, %v1351
    %1353 = vdwg.mxu0
    %v1354 = vand.u32 %v902, 4294901760
    %1355 = vmatpush.msra.mxu0 %v1354
    %v1356 = vand.u32 %v901, 4294901760
    %1357 = vmatpush.msra.mxu0 %v1356
    %v1358 = vand.u32 %v900, 4294901760
    %1359 = vmatpush.msra.mxu0 %v1358
    %v1360 = vand.u32 %v899, 4294901760
    %1361 = vmatpush.msra.mxu0 %v1360
    %v1362 = vand.u32 %v898, 4294901760
    %1363 = vmatpush.msra.mxu0 %v1362
    %v1364 = vand.u32 %v897, 4294901760
    %1365 = vmatpush.msra.mxu0 %v1364
    %v1366 = vand.u32 %v896, 4294901760
    %1367 = vmatpush.msra.mxu0 %v1366
    %v1368 = vand.u32 %v895, 4294901760
    %1369 = vmatpush.msra.mxu0 %v1368
    %v1370 = vand.u32 %v894, 4294901760
    %1371 = vmatpush.msra.mxu0 %v1370
    %v1372 = vand.u32 %v893, 4294901760
    %1373 = vmatpush.msra.mxu0 %v1372
    %v1374 = vand.u32 %v892, 4294901760
    %1375 = vmatpush.msra.mxu0 %v1374
    %v1376 = vand.u32 %v891, 4294901760
    %1377 = vmatpush.msra.mxu0 %v1376
    %v1378 = vand.u32 %v890, 4294901760
    %1379 = vmatpush.msra.mxu0 %v1378
    %v1380 = vand.u32 %v889, 4294901760
    %1381 = vmatpush.msra.mxu0 %v1380
    %v1382 = vand.u32 %v888, 4294901760
    %1383 = vmatpush.msra.mxu0 %v1382
    %v1384 = vand.u32 %v887, 4294901760
    %1385 = vmatpush.msra.mxu0 %v1384
    %v1386 = vand.u32 %v809, 4294901760
    %v1387 = vsub.f32 %v809, %v1386
    %v1388 = vand.u32 %v1387, 4294901760
    %1389 = vmatmul.f32.gmra.mxu0 %v1388
    %v1390 = vpop.f32.mrf.mxu0
    %v1391 = vadd.f32 %v1277, %v1390
    %v1392 = vand.u32 %v813, 4294901760
    %v1393 = vsub.f32 %v813, %v1392
    %v1394 = vand.u32 %v1393, 4294901760
    %1395 = vmatmul.f32.gmra.mxu0 %v1394
    %v1396 = vpop.f32.mrf.mxu0
    %v1397 = vadd.f32 %v1282, %v1396
    %v1398 = vand.u32 %v817, 4294901760
    %v1399 = vsub.f32 %v817, %v1398
    %v1400 = vand.u32 %v1399, 4294901760
    %1401 = vmatmul.f32.gmra.mxu0 %v1400
    %v1402 = vpop.f32.mrf.mxu0
    %v1403 = vadd.f32 %v1287, %v1402
    %v1404 = vand.u32 %v821, 4294901760
    %v1405 = vsub.f32 %v821, %v1404
    %v1406 = vand.u32 %v1405, 4294901760
    %1407 = vmatmul.f32.gmra.mxu0 %v1406
    %v1408 = vpop.f32.mrf.mxu0
    %v1409 = vadd.f32 %v1292, %v1408
    %v1410 = vand.u32 %v825, 4294901760
    %v1411 = vsub.f32 %v825, %v1410
    %v1412 = vand.u32 %v1411, 4294901760
    %1413 = vmatmul.f32.gmra.mxu0 %v1412
    %v1414 = vpop.f32.mrf.mxu0
    %v1415 = vadd.f32 %v1297, %v1414
    %v1416 = vand.u32 %v829, 4294901760
    %v1417 = vsub.f32 %v829, %v1416
    %v1418 = vand.u32 %v1417, 4294901760
    %1419 = vmatmul.f32.gmra.mxu0 %v1418
    %v1420 = vpop.f32.mrf.mxu0
    %v1421 = vadd.f32 %v1302, %v1420
    %v1422 = vand.u32 %v833, 4294901760
    %v1423 = vsub.f32 %v833, %v1422
    %v1424 = vand.u32 %v1423, 4294901760
    %1425 = vmatmul.f32.gmra.mxu0 %v1424
    %v1426 = vpop.f32.mrf.mxu0
    %v1427 = vadd.f32 %v1307, %v1426
    %v1428 = vand.u32 %v837, 4294901760
    %v1429 = vsub.f32 %v837, %v1428
    %v1430 = vand.u32 %v1429, 4294901760
    %1431 = vmatmul.f32.gmra.mxu0 %v1430
    %v1432 = vpop.f32.mrf.mxu0
    %v1433 = vadd.f32 %v1312, %v1432
    %v1434 = vand.u32 %v841, 4294901760
    %v1435 = vsub.f32 %v841, %v1434
    %v1436 = vand.u32 %v1435, 4294901760
    %1437 = vmatmul.f32.gmra.mxu0 %v1436
    %v1438 = vpop.f32.mrf.mxu0
    %v1439 = vadd.f32 %v1317, %v1438
    %v1440 = vand.u32 %v845, 4294901760
    %v1441 = vsub.f32 %v845, %v1440
    %v1442 = vand.u32 %v1441, 4294901760
    %1443 = vmatmul.f32.gmra.mxu0 %v1442
    %v1444 = vpop.f32.mrf.mxu0
    %v1445 = vadd.f32 %v1322, %v1444
    %v1446 = vand.u32 %v849, 4294901760
    %v1447 = vsub.f32 %v849, %v1446
    %v1448 = vand.u32 %v1447, 4294901760
    %1449 = vmatmul.f32.gmra.mxu0 %v1448
    %v1450 = vpop.f32.mrf.mxu0
    %v1451 = vadd.f32 %v1327, %v1450
    %v1452 = vand.u32 %v853, 4294901760
    %v1453 = vsub.f32 %v853, %v1452
    %v1454 = vand.u32 %v1453, 4294901760
    %1455 = vmatmul.f32.gmra.mxu0 %v1454
    %v1456 = vpop.f32.mrf.mxu0
    %v1457 = vadd.f32 %v1332, %v1456
    %v1458 = vand.u32 %v857, 4294901760
    %v1459 = vsub.f32 %v857, %v1458
    %v1460 = vand.u32 %v1459, 4294901760
    %1461 = vmatmul.f32.gmra.mxu0 %v1460
    %v1462 = vpop.f32.mrf.mxu0
    %v1463 = vadd.f32 %v1337, %v1462
    %v1464 = vand.u32 %v861, 4294901760
    %v1465 = vsub.f32 %v861, %v1464
    %v1466 = vand.u32 %v1465, 4294901760
    %1467 = vmatmul.f32.gmra.mxu0 %v1466
    %v1468 = vpop.f32.mrf.mxu0
    %v1469 = vadd.f32 %v1342, %v1468
    %v1470 = vand.u32 %v865, 4294901760
    %v1471 = vsub.f32 %v865, %v1470
    %v1472 = vand.u32 %v1471, 4294901760
    %1473 = vmatmul.f32.gmra.mxu0 %v1472
    %v1474 = vpop.f32.mrf.mxu0
    %v1475 = vadd.f32 %v1347, %v1474
    %v1476 = vand.u32 %v869, 4294901760
    %v1477 = vsub.f32 %v869, %v1476
    %v1478 = vand.u32 %v1477, 4294901760
    %1479 = vmatmul.f32.gmra.mxu0 %v1478
    %v1480 = vpop.f32.mrf.mxu0
    %v1481 = vadd.f32 %v1352, %v1480
    %1482 = vdwg.mxu0
    %v1483 = vand.u32 %v902, 4294901760
    %v1484 = vsub.f32 %v902, %v1483
    %v1485 = vand.u32 %v1484, 4294901760
    %1486 = vmatpush.msra.mxu0 %v1485
    %v1487 = vand.u32 %v901, 4294901760
    %v1488 = vsub.f32 %v901, %v1487
    %v1489 = vand.u32 %v1488, 4294901760
    %1490 = vmatpush.msra.mxu0 %v1489
    %v1491 = vand.u32 %v900, 4294901760
    %v1492 = vsub.f32 %v900, %v1491
    %v1493 = vand.u32 %v1492, 4294901760
    %1494 = vmatpush.msra.mxu0 %v1493
    %v1495 = vand.u32 %v899, 4294901760
    %v1496 = vsub.f32 %v899, %v1495
    %v1497 = vand.u32 %v1496, 4294901760
    %1498 = vmatpush.msra.mxu0 %v1497
    %v1499 = vand.u32 %v898, 4294901760
    %v1500 = vsub.f32 %v898, %v1499
    %v1501 = vand.u32 %v1500, 4294901760
    %1502 = vmatpush.msra.mxu0 %v1501
    %v1503 = vand.u32 %v897, 4294901760
    %v1504 = vsub.f32 %v897, %v1503
    %v1505 = vand.u32 %v1504, 4294901760
    %1506 = vmatpush.msra.mxu0 %v1505
    %v1507 = vand.u32 %v896, 4294901760
    %v1508 = vsub.f32 %v896, %v1507
    %v1509 = vand.u32 %v1508, 4294901760
    %1510 = vmatpush.msra.mxu0 %v1509
    %v1511 = vand.u32 %v895, 4294901760
    %v1512 = vsub.f32 %v895, %v1511
    %v1513 = vand.u32 %v1512, 4294901760
    %1514 = vmatpush.msra.mxu0 %v1513
    %v1515 = vand.u32 %v894, 4294901760
    %v1516 = vsub.f32 %v894, %v1515
    %v1517 = vand.u32 %v1516, 4294901760
    %1518 = vmatpush.msra.mxu0 %v1517
    %v1519 = vand.u32 %v893, 4294901760
    %v1520 = vsub.f32 %v893, %v1519
    %v1521 = vand.u32 %v1520, 4294901760
    %1522 = vmatpush.msra.mxu0 %v1521
    %v1523 = vand.u32 %v892, 4294901760
    %v1524 = vsub.f32 %v892, %v1523
    %v1525 = vand.u32 %v1524, 4294901760
    %1526 = vmatpush.msra.mxu0 %v1525
    %v1527 = vand.u32 %v891, 4294901760
    %v1528 = vsub.f32 %v891, %v1527
    %v1529 = vand.u32 %v1528, 4294901760
    %1530 = vmatpush.msra.mxu0 %v1529
    %v1531 = vand.u32 %v890, 4294901760
    %v1532 = vsub.f32 %v890, %v1531
    %v1533 = vand.u32 %v1532, 4294901760
    %1534 = vmatpush.msra.mxu0 %v1533
    %v1535 = vand.u32 %v889, 4294901760
    %v1536 = vsub.f32 %v889, %v1535
    %v1537 = vand.u32 %v1536, 4294901760
    %1538 = vmatpush.msra.mxu0 %v1537
    %v1539 = vand.u32 %v888, 4294901760
    %v1540 = vsub.f32 %v888, %v1539
    %v1541 = vand.u32 %v1540, 4294901760
    %1542 = vmatpush.msra.mxu0 %v1541
    %v1543 = vand.u32 %v887, 4294901760
    %v1544 = vsub.f32 %v887, %v1543
    %v1545 = vand.u32 %v1544, 4294901760
    %1546 = vmatpush.msra.mxu0 %v1545
    %v1547 = vand.u32 %v809, 4294901760
    %1548 = vmatmul.f32.gmra.mxu0 %v1547
    %v1549 = vpop.f32.mrf.mxu0
    %v1550 = vadd.f32 %v1391, %v1549
    %v1551 = vand.u32 %v813, 4294901760
    %1552 = vmatmul.f32.gmra.mxu0 %v1551
    %v1553 = vpop.f32.mrf.mxu0
    %v1554 = vadd.f32 %v1397, %v1553
    %v1555 = vand.u32 %v817, 4294901760
    %1556 = vmatmul.f32.gmra.mxu0 %v1555
    %v1557 = vpop.f32.mrf.mxu0
    %v1558 = vadd.f32 %v1403, %v1557
    %v1559 = vand.u32 %v821, 4294901760
    %1560 = vmatmul.f32.gmra.mxu0 %v1559
    %v1561 = vpop.f32.mrf.mxu0
    %v1562 = vadd.f32 %v1409, %v1561
    %v1563 = vand.u32 %v825, 4294901760
    %1564 = vmatmul.f32.gmra.mxu0 %v1563
    %v1565 = vpop.f32.mrf.mxu0
    %v1566 = vadd.f32 %v1415, %v1565
    %v1567 = vand.u32 %v829, 4294901760
    %1568 = vmatmul.f32.gmra.mxu0 %v1567
    %v1569 = vpop.f32.mrf.mxu0
    %v1570 = vadd.f32 %v1421, %v1569
    %v1571 = vand.u32 %v833, 4294901760
    %1572 = vmatmul.f32.gmra.mxu0 %v1571
    %v1573 = vpop.f32.mrf.mxu0
    %v1574 = vadd.f32 %v1427, %v1573
    %v1575 = vand.u32 %v837, 4294901760
    %1576 = vmatmul.f32.gmra.mxu0 %v1575
    %v1577 = vpop.f32.mrf.mxu0
    %v1578 = vadd.f32 %v1433, %v1577
    %v1579 = vand.u32 %v841, 4294901760
    %1580 = vmatmul.f32.gmra.mxu0 %v1579
    %v1581 = vpop.f32.mrf.mxu0
    %v1582 = vadd.f32 %v1439, %v1581
    %v1583 = vand.u32 %v845, 4294901760
    %1584 = vmatmul.f32.gmra.mxu0 %v1583
    %v1585 = vpop.f32.mrf.mxu0
    %v1586 = vadd.f32 %v1445, %v1585
    %v1587 = vand.u32 %v849, 4294901760
    %1588 = vmatmul.f32.gmra.mxu0 %v1587
    %v1589 = vpop.f32.mrf.mxu0
    %v1590 = vadd.f32 %v1451, %v1589
    %v1591 = vand.u32 %v853, 4294901760
    %1592 = vmatmul.f32.gmra.mxu0 %v1591
    %v1593 = vpop.f32.mrf.mxu0
    %v1594 = vadd.f32 %v1457, %v1593
    %v1595 = vand.u32 %v857, 4294901760
    %1596 = vmatmul.f32.gmra.mxu0 %v1595
    %v1597 = vpop.f32.mrf.mxu0
    %v1598 = vadd.f32 %v1463, %v1597
    %v1599 = vand.u32 %v861, 4294901760
    %1600 = vmatmul.f32.gmra.mxu0 %v1599
    %v1601 = vpop.f32.mrf.mxu0
    %v1602 = vadd.f32 %v1469, %v1601
    %v1603 = vand.u32 %v865, 4294901760
    %1604 = vmatmul.f32.gmra.mxu0 %v1603
    %v1605 = vpop.f32.mrf.mxu0
    %v1606 = vadd.f32 %v1475, %v1605
    %v1607 = vand.u32 %v869, 4294901760
    %1608 = vmatmul.f32.gmra.mxu0 %v1607
    %v1609 = vpop.f32.mrf.mxu0
    %v1610 = vadd.f32 %v1481, %v1609
    %1611 = vdwg.mxu0
    %v1612 = vand.u32 %v902, 4294901760
    %1613 = vmatpush.msra.mxu0 %v1612
    %v1614 = vand.u32 %v901, 4294901760
    %1615 = vmatpush.msra.mxu0 %v1614
    %v1616 = vand.u32 %v900, 4294901760
    %1617 = vmatpush.msra.mxu0 %v1616
    %v1618 = vand.u32 %v899, 4294901760
    %1619 = vmatpush.msra.mxu0 %v1618
    %v1620 = vand.u32 %v898, 4294901760
    %1621 = vmatpush.msra.mxu0 %v1620
    %v1622 = vand.u32 %v897, 4294901760
    %1623 = vmatpush.msra.mxu0 %v1622
    %v1624 = vand.u32 %v896, 4294901760
    %1625 = vmatpush.msra.mxu0 %v1624
    %v1626 = vand.u32 %v895, 4294901760
    %1627 = vmatpush.msra.mxu0 %v1626
    %v1628 = vand.u32 %v894, 4294901760
    %1629 = vmatpush.msra.mxu0 %v1628
    %v1630 = vand.u32 %v893, 4294901760
    %1631 = vmatpush.msra.mxu0 %v1630
    %v1632 = vand.u32 %v892, 4294901760
    %1633 = vmatpush.msra.mxu0 %v1632
    %v1634 = vand.u32 %v891, 4294901760
    %1635 = vmatpush.msra.mxu0 %v1634
    %v1636 = vand.u32 %v890, 4294901760
    %1637 = vmatpush.msra.mxu0 %v1636
    %v1638 = vand.u32 %v889, 4294901760
    %1639 = vmatpush.msra.mxu0 %v1638
    %v1640 = vand.u32 %v888, 4294901760
    %1641 = vmatpush.msra.mxu0 %v1640
    %v1642 = vand.u32 %v887, 4294901760
    %1643 = vmatpush.msra.mxu0 %v1642
    %v1644 = vand.u32 %v809, 4294901760
    %1645 = vmatmul.f32.gmra.mxu0 %v1644
    %v1646 = vpop.f32.mrf.mxu0
    %v1647 = vadd.f32 %v1550, %v1646
    %v1648 = vand.u32 %v813, 4294901760
    %1649 = vmatmul.f32.gmra.mxu0 %v1648
    %v1650 = vpop.f32.mrf.mxu0
    %v1651 = vadd.f32 %v1554, %v1650
    %v1652 = vand.u32 %v817, 4294901760
    %1653 = vmatmul.f32.gmra.mxu0 %v1652
    %v1654 = vpop.f32.mrf.mxu0
    %v1655 = vadd.f32 %v1558, %v1654
    %v1656 = vand.u32 %v821, 4294901760
    %1657 = vmatmul.f32.gmra.mxu0 %v1656
    %v1658 = vpop.f32.mrf.mxu0
    %v1659 = vadd.f32 %v1562, %v1658
    %v1660 = vand.u32 %v825, 4294901760
    %1661 = vmatmul.f32.gmra.mxu0 %v1660
    %v1662 = vpop.f32.mrf.mxu0
    %v1663 = vadd.f32 %v1566, %v1662
    %v1664 = vand.u32 %v829, 4294901760
    %1665 = vmatmul.f32.gmra.mxu0 %v1664
    %v1666 = vpop.f32.mrf.mxu0
    %v1667 = vadd.f32 %v1570, %v1666
    %v1668 = vand.u32 %v833, 4294901760
    %1669 = vmatmul.f32.gmra.mxu0 %v1668
    %v1670 = vpop.f32.mrf.mxu0
    %v1671 = vadd.f32 %v1574, %v1670
    %v1672 = vand.u32 %v837, 4294901760
    %1673 = vmatmul.f32.gmra.mxu0 %v1672
    %v1674 = vpop.f32.mrf.mxu0
    %v1675 = vadd.f32 %v1578, %v1674
    %v1676 = vand.u32 %v841, 4294901760
    %1677 = vmatmul.f32.gmra.mxu0 %v1676
    %v1678 = vpop.f32.mrf.mxu0
    %v1679 = vadd.f32 %v1582, %v1678
    %v1680 = vand.u32 %v845, 4294901760
    %1681 = vmatmul.f32.gmra.mxu0 %v1680
    %v1682 = vpop.f32.mrf.mxu0
    %v1683 = vadd.f32 %v1586, %v1682
    %v1684 = vand.u32 %v849, 4294901760
    %1685 = vmatmul.f32.gmra.mxu0 %v1684
    %v1686 = vpop.f32.mrf.mxu0
    %v1687 = vadd.f32 %v1590, %v1686
    %v1688 = vand.u32 %v853, 4294901760
    %1689 = vmatmul.f32.gmra.mxu0 %v1688
    %v1690 = vpop.f32.mrf.mxu0
    %v1691 = vadd.f32 %v1594, %v1690
    %v1692 = vand.u32 %v857, 4294901760
    %1693 = vmatmul.f32.gmra.mxu0 %v1692
    %v1694 = vpop.f32.mrf.mxu0
    %v1695 = vadd.f32 %v1598, %v1694
    %v1696 = vand.u32 %v861, 4294901760
    %1697 = vmatmul.f32.gmra.mxu0 %v1696
    %v1698 = vpop.f32.mrf.mxu0
    %v1699 = vadd.f32 %v1602, %v1698
    %v1700 = vand.u32 %v865, 4294901760
    %1701 = vmatmul.f32.gmra.mxu0 %v1700
    %v1702 = vpop.f32.mrf.mxu0
    %v1703 = vadd.f32 %v1606, %v1702
    %v1704 = vand.u32 %v869, 4294901760
    %1705 = vmatmul.f32.gmra.mxu0 %v1704
    %v1706 = vpop.f32.mrf.mxu0
    %v1707 = vadd.f32 %v1610, %v1706
    %1708 = vdwg.mxu0
    %vm1709 = vcmask 15360
    %1710 = vst.msk [vmem:[%s4] sm:$0xff] %vm1709, %v1647
    %1711 = vst.msk [vmem:[%s4 + $0x8] sm:$0xff] %vm1709, %v1651
    %1712 = vst.msk [vmem:[%s4 + $0x10] sm:$0xff] %vm1709, %v1655
    %1713 = vst.msk [vmem:[%s4 + $0x18] sm:$0xff] %vm1709, %v1659
    %1714 = vst.msk [vmem:[%s4 + $0x20] sm:$0xff] %vm1709, %v1663
    %1715 = vst.msk [vmem:[%s4 + $0x28] sm:$0xff] %vm1709, %v1667
    %1716 = vst.msk [vmem:[%s4 + $0x30] sm:$0xff] %vm1709, %v1671
    %1717 = vst.msk [vmem:[%s4 + $0x38] sm:$0xff] %vm1709, %v1675
    %1718 = vst.msk [vmem:[%s4 + $0x40] sm:$0xff] %vm1709, %v1679
    %1719 = vst.msk [vmem:[%s4 + $0x48] sm:$0xff] %vm1709, %v1683
    %1720 = vst.msk [vmem:[%s4 + $0x50] sm:$0xff] %vm1709, %v1687
    %1721 = vst.msk [vmem:[%s4 + $0x58] sm:$0xff] %vm1709, %v1691
    %1722 = vst.msk [vmem:[%s4 + $0x60] sm:$0xff] %vm1709, %v1695
    %1723 = vst.msk [vmem:[%s4 + $0x68] sm:$0xff] %vm1709, %v1699
    %1724 = vst.msk [vmem:[%s4 + $0x70] sm:$0xff] %vm1709, %v1703
    %1725 = vst.msk [vmem:[%s4 + $0x78] sm:$0xff] %vm1709, %v1707
    // Predicated region
    $region18: #{tpu_custom_call.1} parent=1 // pred_check
      _
    $region19: #{tpu_custom_call.1} parent=1 // pred_check_branch
      %1727 = sbr.rel (0) target = $region21
    $region20: #{tpu_custom_call.1} parent=1 // pred_region
      %1729 = vsyncadd [#allocation4], 0
      %s1730 = sshll.u32 [#allocation5], 4
      %s1731 = int_to_ptr.vmem [resolvable:$true] %s1730
      %s1732 = sshll.u32 %s3, 4
      %s1733 = int_to_ptr.hbm [resolvable:$true] %s1732
      %1738 = dma.vmem_to_hbm [thread:$0]  %s1731, 2048, %s1733, [#allocation4], 128, 128, 8
    $region21: #{tpu_custom_call.1} parent=1 // pred_fallthru
      _
    // Predicated region
    $region22: #{tpu_custom_call.1} parent=1 // pred_check
      _
    $region23: #{tpu_custom_call.1} parent=1 // pred_check_branch
      %1740 = sbr.rel (0) target = $region25
    $region24: #{tpu_custom_call.1} parent=1 // pred_region
      _
    $region25: #{tpu_custom_call.1} parent=1 // pred_fallthru
      _
    // Predicated region
    $region26: #{tpu_custom_call.1} parent=1 // pred_check
      _
    $region27: #{tpu_custom_call.1} parent=1 // pred_check_branch
      %1742 = sbr.rel (0) target = $region29
    $region28: #{tpu_custom_call.1} parent=1 // pred_region
      %1744 = dma.done [#allocation4], 2048
    $region29: #{tpu_custom_call.1} parent=1 // pred_fallthru
      _
    // Predicated region
    $region30: #{tpu_custom_call.1} parent=1 // pred_check
      _
    $region31: #{tpu_custom_call.1} parent=1 // pred_check_branch
      %1746 = sbr.rel (0) target = $region33
    $region32: #{tpu_custom_call.1} parent=1 // pred_region
      _
    $region33: #{tpu_custom_call.1} parent=1 // pred_fallthru
      _
    %1747 = vsyncpa [#allocation3], 1
    %1748 = vsyncpa [#allocation4], 1

</llo_original>
